<compile_context>
chip_gen: v7x
topology: tpu7x:2x2x1
jax: 0.10.0
libtpu: 0.0.40
codegen_flags: <defaults>
</compile_context>

<pallas_src>
import jax
import jax.numpy as jnp
import numpy as np
from jax.experimental import pallas as pl
from jax.experimental.pallas import tpu as pltpu

NUM_INPUTS = 113 * 8      # 904  (LSTM input size)
HIDDEN = 16               # LSTM hidden units
OUT = 113 * 8             # 904  (Linear output features)
OUT_PAD = 1024            # lane-dense (multiple of 128) padded output width


def lstm_net_fused_kernel(x_ref, wih_ref, whh_ref, b_ref, wlin_ref, blin_ref,
                          out_ref):
    """Entire LSTMNet forward in one invocation.

    x_ref    : (T*B, D)   bf16, time-major rows (rows t*B .. t*B+B-1 = step t)
    wih_ref  : (D, 4H)    bf16   (W_ih^T)
    whh_ref  : (H, 4H)    f32    (W_hh^T)
    b_ref    : (1, 4H)    f32    (b_ih + b_hh)
    wlin_ref : (H, OUT_PAD) bf16 (W_lin^T, zero-padded)
    blin_ref : (1, OUT_PAD) f32  (b_lin, zero-padded)
    out_ref  : (B, OUT_PAD) f32
    """
    TB, _ = x_ref.shape
    B = out_ref.shape[0]
    T = TB // B
    H = whh_ref.shape[0]

    # (1) Hoisted input projection: one big bf16 MXU matmul, f32 accumulation,
    #     bias added once for all timesteps.
    gates_x = jnp.dot(x_ref[...], wih_ref[...],
                      preferred_element_type=jnp.float32) + b_ref[...]   # (T*B, 4H)

    whh = whh_ref[...]                                                   # (H, 4H) f32

    # (2) Recurrence: fully unrolled static loop (T small). Per step: tiny
    #     h @ W_hh dot + elementwise gate math in f32.
    h = jnp.zeros((B, H), jnp.float32)
    c = jnp.zeros((B, H), jnp.float32)
    for t in range(T):
        gates = gates_x[t * B:(t + 1) * B, :] + jnp.dot(
            h, whh, preferred_element_type=jnp.float32)                  # (B, 4H)
        sig = jax.nn.sigmoid(gates)      # full-width EUP op over the (B, 4H) tile
        th = jnp.tanh(gates)             # full-width EUP op over the (B, 4H) tile
        i = sig[:, 0 * H:1 * H]          # PyTorch gate order: i, f, g, o
        f = sig[:, 1 * H:2 * H]
        g = th[:, 2 * H:3 * H]
        o = sig[:, 3 * H:4 * H]
        c = f * c + i * g
        h = o * jnp.tanh(c)

    # (3) Epilogue: ReLU -> Linear (lane-dense padded N) -> Sigmoid.
    hr = jnp.maximum(h, 0.0).astype(wlin_ref.dtype)
    y = jnp.dot(hr, wlin_ref[...],
                preferred_element_type=jnp.float32) + blin_ref[...]
    out_ref[...] = jax.nn.sigmoid(y)


@jax.jit
def lstm_net_forward(x, params):
    """x: (B, T, NUM_INPUTS) float32 -> (B, OUT) float32."""
    B, T, D = x.shape
    assert D == NUM_INPUTS

    # Time-major bf16 input: reorder + cast fused into a single wrapper pass.
    x_tm = jnp.transpose(x, (1, 0, 2)).reshape(T * B, D).astype(jnp.bfloat16)

    wih_t = jnp.transpose(params["w_ih"]).astype(jnp.bfloat16)          # (D, 4H)
    whh_t = jnp.transpose(params["w_hh"])                               # (H, 4H) f32
    b = (params["b_ih"] + params["b_hh"]).reshape(1, 4 * HIDDEN)        # (1, 4H) f32

    # Pad output features 904 -> 1024 (zeros) for lane-dense matmul N / stores.
    wlin_t = jnp.pad(jnp.transpose(params["w_lin"]),
                     ((0, 0), (0, OUT_PAD - OUT))).astype(jnp.bfloat16)  # (H, 1024)
    blin = jnp.pad(params["b_lin"], (0, OUT_PAD - OUT)).reshape(1, OUT_PAD)

    out_padded = pl.pallas_call(
        lstm_net_fused_kernel,
        out_shape=jax.ShapeDtypeStruct((B, OUT_PAD), jnp.float32),
        in_specs=[pl.BlockSpec(memory_space=pltpu.MemorySpace.VMEM)] * 6,
        out_specs=pl.BlockSpec(memory_space=pltpu.MemorySpace.VMEM),
    )(x_tm, wih_t, whh_t, b, wlin_t, blin)

    return out_padded[:, :OUT]


def init_params(key):
    """Deterministic init matching PyTorch parameter shapes (uniform +-1/sqrt(H))."""
    ks = jax.random.split(key, 6)
    stdv = 1.0 / np.sqrt(HIDDEN)

    def u(k, shape):
        return jax.random.uniform(k, shape, jnp.float32, -stdv, stdv)

    return {
        "w_ih": u(ks[0], (4 * HIDDEN, NUM_INPUTS)),   # weight_ih_l0
        "w_hh": u(ks[1], (4 * HIDDEN, HIDDEN)),       # weight_hh_l0
        "b_ih": u(ks[2], (4 * HIDDEN,)),              # bias_ih_l0
        "b_hh": u(ks[3], (4 * HIDDEN,)),              # bias_hh_l0
        "w_lin": u(ks[4], (OUT, HIDDEN)),             # linear.weight
        "b_lin": u(ks[5], (OUT,)),                    # linear.bias
    }


def reference_forward(x, params):
    """Pure-JAX reference with the same mixed precision as the kernel
    (bf16 operands / f32 accumulation on the two big matmuls, f32 recurrence);
    otherwise identical to the PyTorch forward pass."""
    B, T, D = x.shape
    x_bf = x.astype(jnp.bfloat16)
    wih_t = params["w_ih"].T.astype(jnp.bfloat16)
    whh_t = params["w_hh"].T
    b = (params["b_ih"] + params["b_hh"])[None, :]

    h = jnp.zeros((B, HIDDEN), jnp.float32)
    c = jnp.zeros((B, HIDDEN), jnp.float32)
    for t in range(T):
        gates = (jnp.dot(x_bf[:, t, :], wih_t, preferred_element_type=jnp.float32)
                 + jnp.dot(h, whh_t, preferred_element_type=jnp.float32) + b)
        i = jax.nn.sigmoid(gates[:, 0 * HIDDEN:1 * HIDDEN])
        f = jax.nn.sigmoid(gates[:, 1 * HIDDEN:2 * HIDDEN])
        g = jnp.tanh(gates[:, 2 * HIDDEN:3 * HIDDEN])
        o = jax.nn.sigmoid(gates[:, 3 * HIDDEN:4 * HIDDEN])
        c = f * c + i * g
        h = o * jnp.tanh(c)

    hr = jnp.maximum(h, 0.0).astype(jnp.bfloat16)
    y = jnp.dot(hr, params["w_lin"].T.astype(jnp.bfloat16),
                preferred_element_type=jnp.float32) + params["b_lin"][None, :]
    return jax.nn.sigmoid(y)


if __name__ == "__main__":
    key = jax.random.PRNGKey(0)
    k_param, k_x = jax.random.split(key)

    params = init_params(k_param)

    B, T = 2, 8
    x = jax.random.normal(k_x, (B, T, NUM_INPUTS), jnp.float32)

    out = lstm_net_forward(x, params)
    out = jax.block_until_ready(out)

    ref = reference_forward(x, params)
    np.testing.assert_allclose(np.asarray(out), np.asarray(ref),
                               rtol=1e-3, atol=1e-3)

    print("KERNEL_OK")
</pallas_src>

<mosaic_0001>
module attributes {stable_mosaic.version = 11 : i64} {
  func.func @lstm_net_fused_kernel(%arg0: memref<16x904xbf16, #tpu.memory_space<vmem>>, %arg1: memref<904x64xbf16, #tpu.memory_space<vmem>>, %arg2: memref<16x64xf32, #tpu.memory_space<vmem>>, %arg3: memref<1x64xf32, #tpu.memory_space<vmem>>, %arg4: memref<16x1024xbf16, #tpu.memory_space<vmem>>, %arg5: memref<1x1024xf32, #tpu.memory_space<vmem>>, %arg6: memref<2x1024xf32, #tpu.memory_space<vmem>>) attributes {dimension_semantics = [], scalar_prefetch = 0 : i64, scratch_operands = 0 : i64, tpu.core_type = #tpu.core_type<tc>} {
    %c0 = arith.constant 0 : index
    %c0_0 = arith.constant 0 : index
    %0 = vector.load %arg0[%c0, %c0_0] : memref<16x904xbf16, #tpu.memory_space<vmem>>, vector<16x904xbf16>
    %c0_1 = arith.constant 0 : index
    %c0_2 = arith.constant 0 : index
    %1 = vector.load %arg1[%c0_1, %c0_2] : memref<904x64xbf16, #tpu.memory_space<vmem>>, vector<904x64xbf16>
    %cst = arith.constant dense<0.000000e+00> : vector<16x64xf32>
    %2 = tpu.matmul %0, %1, %cst {dimension_numbers = #tpu.dot_dimension_numbers<[1], [0], [0], [1], [0, 0, 1, 1], [], []>} : vector<16x904xbf16>, vector<904x64xbf16>, vector<16x64xf32> -> vector<16x64xf32>
    %c0_3 = arith.constant 0 : index
    %c0_4 = arith.constant 0 : index
    %3 = vector.load %arg3[%c0_3, %c0_4] : memref<1x64xf32, #tpu.memory_space<vmem>>, vector<1x64xf32>
    %4 = vector.broadcast %3 : vector<1x64xf32> to vector<16x64xf32>
    %5 = arith.addf %2, %4 : vector<16x64xf32>
    %c0_5 = arith.constant 0 : index
    %c0_6 = arith.constant 0 : index
    %6 = vector.load %arg2[%c0_5, %c0_6] : memref<16x64xf32, #tpu.memory_space<vmem>>, vector<16x64xf32>
    %cst_7 = arith.constant 0.000000e+00 : f32
    %7 = vector.broadcast %cst_7 : f32 to vector<2x16xf32>
    %cst_8 = arith.constant 0.000000e+00 : f32
    %8 = vector.broadcast %cst_8 : f32 to vector<2x16xf32>
    %9 = vector.extract_strided_slice %5 {offsets = [0, 0], sizes = [2, 64], strides = [1, 1]} : vector<16x64xf32> to vector<2x64xf32>
    %cst_9 = arith.constant dense<0.000000e+00> : vector<2x64xf32>
    %10 = tpu.matmul %7, %6, %cst_9 {dimension_numbers = #tpu.dot_dimension_numbers<[1], [0], [0], [1], [0, 0, 1, 1], [], []>} : vector<2x16xf32>, vector<16x64xf32>, vector<2x64xf32> -> vector<2x64xf32>
    %11 = arith.addf %9, %10 : vector<2x64xf32>
    %12 = arith.negf %11 : vector<2x64xf32>
    %13 = math.exp %12 : vector<2x64xf32>
    %cst_10 = arith.constant 1.000000e+00 : f32
    %14 = vector.broadcast %cst_10 : f32 to vector<2x64xf32>
    %15 = arith.addf %14, %13 : vector<2x64xf32>
    %16 = arith.divf %14, %15 : vector<2x64xf32>
    %17 = math.tanh %11 : vector<2x64xf32>
    %18 = vector.extract_strided_slice %16 {offsets = [0, 0], sizes = [2, 16], strides = [1, 1]} : vector<2x64xf32> to vector<2x16xf32>
    %19 = vector.extract_strided_slice %16 {offsets = [0, 16], sizes = [2, 16], strides = [1, 1]} : vector<2x64xf32> to vector<2x16xf32>
    %20 = vector.extract_strided_slice %17 {offsets = [0, 32], sizes = [2, 16], strides = [1, 1]} : vector<2x64xf32> to vector<2x16xf32>
    %21 = vector.extract_strided_slice %16 {offsets = [0, 48], sizes = [2, 16], strides = [1, 1]} : vector<2x64xf32> to vector<2x16xf32>
    %22 = arith.mulf %19, %8 : vector<2x16xf32>
    %23 = arith.mulf %18, %20 : vector<2x16xf32>
    %24 = arith.addf %22, %23 : vector<2x16xf32>
    %25 = math.tanh %24 : vector<2x16xf32>
    %26 = arith.mulf %21, %25 : vector<2x16xf32>
    %27 = vector.extract_strided_slice %5 {offsets = [2, 0], sizes = [2, 64], strides = [1, 1]} : vector<16x64xf32> to vector<2x64xf32>
    %cst_11 = arith.constant dense<0.000000e+00> : vector<2x64xf32>
    %28 = tpu.matmul %26, %6, %cst_11 {dimension_numbers = #tpu.dot_dimension_numbers<[1], [0], [0], [1], [0, 0, 1, 1], [], []>} : vector<2x16xf32>, vector<16x64xf32>, vector<2x64xf32> -> vector<2x64xf32>
    %29 = arith.addf %27, %28 : vector<2x64xf32>
    %30 = arith.negf %29 : vector<2x64xf32>
    %31 = math.exp %30 : vector<2x64xf32>
    %cst_12 = arith.constant 1.000000e+00 : f32
    %32 = vector.broadcast %cst_12 : f32 to vector<2x64xf32>
    %33 = arith.addf %32, %31 : vector<2x64xf32>
    %34 = arith.divf %32, %33 : vector<2x64xf32>
    %35 = math.tanh %29 : vector<2x64xf32>
    %36 = vector.extract_strided_slice %34 {offsets = [0, 0], sizes = [2, 16], strides = [1, 1]} : vector<2x64xf32> to vector<2x16xf32>
    %37 = vector.extract_strided_slice %34 {offsets = [0, 16], sizes = [2, 16], strides = [1, 1]} : vector<2x64xf32> to vector<2x16xf32>
    %38 = vector.extract_strided_slice %35 {offsets = [0, 32], sizes = [2, 16], strides = [1, 1]} : vector<2x64xf32> to vector<2x16xf32>
    %39 = vector.extract_strided_slice %34 {offsets = [0, 48], sizes = [2, 16], strides = [1, 1]} : vector<2x64xf32> to vector<2x16xf32>
    %40 = arith.mulf %37, %24 : vector<2x16xf32>
    %41 = arith.mulf %36, %38 : vector<2x16xf32>
    %42 = arith.addf %40, %41 : vector<2x16xf32>
    %43 = math.tanh %42 : vector<2x16xf32>
    %44 = arith.mulf %39, %43 : vector<2x16xf32>
    %45 = vector.extract_strided_slice %5 {offsets = [4, 0], sizes = [2, 64], strides = [1, 1]} : vector<16x64xf32> to vector<2x64xf32>
    %cst_13 = arith.constant dense<0.000000e+00> : vector<2x64xf32>
    %46 = tpu.matmul %44, %6, %cst_13 {dimension_numbers = #tpu.dot_dimension_numbers<[1], [0], [0], [1], [0, 0, 1, 1], [], []>} : vector<2x16xf32>, vector<16x64xf32>, vector<2x64xf32> -> vector<2x64xf32>
    %47 = arith.addf %45, %46 : vector<2x64xf32>
    %48 = arith.negf %47 : vector<2x64xf32>
    %49 = math.exp %48 : vector<2x64xf32>
    %cst_14 = arith.constant 1.000000e+00 : f32
    %50 = vector.broadcast %cst_14 : f32 to vector<2x64xf32>
    %51 = arith.addf %50, %49 : vector<2x64xf32>
    %52 = arith.divf %50, %51 : vector<2x64xf32>
    %53 = math.tanh %47 : vector<2x64xf32>
    %54 = vector.extract_strided_slice %52 {offsets = [0, 0], sizes = [2, 16], strides = [1, 1]} : vector<2x64xf32> to vector<2x16xf32>
    %55 = vector.extract_strided_slice %52 {offsets = [0, 16], sizes = [2, 16], strides = [1, 1]} : vector<2x64xf32> to vector<2x16xf32>
    %56 = vector.extract_strided_slice %53 {offsets = [0, 32], sizes = [2, 16], strides = [1, 1]} : vector<2x64xf32> to vector<2x16xf32>
    %57 = vector.extract_strided_slice %52 {offsets = [0, 48], sizes = [2, 16], strides = [1, 1]} : vector<2x64xf32> to vector<2x16xf32>
    %58 = arith.mulf %55, %42 : vector<2x16xf32>
    %59 = arith.mulf %54, %56 : vector<2x16xf32>
    %60 = arith.addf %58, %59 : vector<2x16xf32>
    %61 = math.tanh %60 : vector<2x16xf32>
    %62 = arith.mulf %57, %61 : vector<2x16xf32>
    %63 = vector.extract_strided_slice %5 {offsets = [6, 0], sizes = [2, 64], strides = [1, 1]} : vector<16x64xf32> to vector<2x64xf32>
    %cst_15 = arith.constant dense<0.000000e+00> : vector<2x64xf32>
    %64 = tpu.matmul %62, %6, %cst_15 {dimension_numbers = #tpu.dot_dimension_numbers<[1], [0], [0], [1], [0, 0, 1, 1], [], []>} : vector<2x16xf32>, vector<16x64xf32>, vector<2x64xf32> -> vector<2x64xf32>
    %65 = arith.addf %63, %64 : vector<2x64xf32>
    %66 = arith.negf %65 : vector<2x64xf32>
    %67 = math.exp %66 : vector<2x64xf32>
    %cst_16 = arith.constant 1.000000e+00 : f32
    %68 = vector.broadcast %cst_16 : f32 to vector<2x64xf32>
    %69 = arith.addf %68, %67 : vector<2x64xf32>
    %70 = arith.divf %68, %69 : vector<2x64xf32>
    %71 = math.tanh %65 : vector<2x64xf32>
    %72 = vector.extract_strided_slice %70 {offsets = [0, 0], sizes = [2, 16], strides = [1, 1]} : vector<2x64xf32> to vector<2x16xf32>
    %73 = vector.extract_strided_slice %70 {offsets = [0, 16], sizes = [2, 16], strides = [1, 1]} : vector<2x64xf32> to vector<2x16xf32>
    %74 = vector.extract_strided_slice %71 {offsets = [0, 32], sizes = [2, 16], strides = [1, 1]} : vector<2x64xf32> to vector<2x16xf32>
    %75 = vector.extract_strided_slice %70 {offsets = [0, 48], sizes = [2, 16], strides = [1, 1]} : vector<2x64xf32> to vector<2x16xf32>
    %76 = arith.mulf %73, %60 : vector<2x16xf32>
    %77 = arith.mulf %72, %74 : vector<2x16xf32>
    %78 = arith.addf %76, %77 : vector<2x16xf32>
    %79 = math.tanh %78 : vector<2x16xf32>
    %80 = arith.mulf %75, %79 : vector<2x16xf32>
    %81 = vector.extract_strided_slice %5 {offsets = [8, 0], sizes = [2, 64], strides = [1, 1]} : vector<16x64xf32> to vector<2x64xf32>
    %cst_17 = arith.constant dense<0.000000e+00> : vector<2x64xf32>
    %82 = tpu.matmul %80, %6, %cst_17 {dimension_numbers = #tpu.dot_dimension_numbers<[1], [0], [0], [1], [0, 0, 1, 1], [], []>} : vector<2x16xf32>, vector<16x64xf32>, vector<2x64xf32> -> vector<2x64xf32>
    %83 = arith.addf %81, %82 : vector<2x64xf32>
    %84 = arith.negf %83 : vector<2x64xf32>
    %85 = math.exp %84 : vector<2x64xf32>
    %cst_18 = arith.constant 1.000000e+00 : f32
    %86 = vector.broadcast %cst_18 : f32 to vector<2x64xf32>
    %87 = arith.addf %86, %85 : vector<2x64xf32>
    %88 = arith.divf %86, %87 : vector<2x64xf32>
    %89 = math.tanh %83 : vector<2x64xf32>
    %90 = vector.extract_strided_slice %88 {offsets = [0, 0], sizes = [2, 16], strides = [1, 1]} : vector<2x64xf32> to vector<2x16xf32>
    %91 = vector.extract_strided_slice %88 {offsets = [0, 16], sizes = [2, 16], strides = [1, 1]} : vector<2x64xf32> to vector<2x16xf32>
    %92 = vector.extract_strided_slice %89 {offsets = [0, 32], sizes = [2, 16], strides = [1, 1]} : vector<2x64xf32> to vector<2x16xf32>
    %93 = vector.extract_strided_slice %88 {offsets = [0, 48], sizes = [2, 16], strides = [1, 1]} : vector<2x64xf32> to vector<2x16xf32>
    %94 = arith.mulf %91, %78 : vector<2x16xf32>
    %95 = arith.mulf %90, %92 : vector<2x16xf32>
    %96 = arith.addf %94, %95 : vector<2x16xf32>
    %97 = math.tanh %96 : vector<2x16xf32>
    %98 = arith.mulf %93, %97 : vector<2x16xf32>
    %99 = vector.extract_strided_slice %5 {offsets = [10, 0], sizes = [2, 64], strides = [1, 1]} : vector<16x64xf32> to vector<2x64xf32>
    %cst_19 = arith.constant dense<0.000000e+00> : vector<2x64xf32>
    %100 = tpu.matmul %98, %6, %cst_19 {dimension_numbers = #tpu.dot_dimension_numbers<[1], [0], [0], [1], [0, 0, 1, 1], [], []>} : vector<2x16xf32>, vector<16x64xf32>, vector<2x64xf32> -> vector<2x64xf32>
    %101 = arith.addf %99, %100 : vector<2x64xf32>
    %102 = arith.negf %101 : vector<2x64xf32>
    %103 = math.exp %102 : vector<2x64xf32>
    %cst_20 = arith.constant 1.000000e+00 : f32
    %104 = vector.broadcast %cst_20 : f32 to vector<2x64xf32>
    %105 = arith.addf %104, %103 : vector<2x64xf32>
    %106 = arith.divf %104, %105 : vector<2x64xf32>
    %107 = math.tanh %101 : vector<2x64xf32>
    %108 = vector.extract_strided_slice %106 {offsets = [0, 0], sizes = [2, 16], strides = [1, 1]} : vector<2x64xf32> to vector<2x16xf32>
    %109 = vector.extract_strided_slice %106 {offsets = [0, 16], sizes = [2, 16], strides = [1, 1]} : vector<2x64xf32> to vector<2x16xf32>
    %110 = vector.extract_strided_slice %107 {offsets = [0, 32], sizes = [2, 16], strides = [1, 1]} : vector<2x64xf32> to vector<2x16xf32>
    %111 = vector.extract_strided_slice %106 {offsets = [0, 48], sizes = [2, 16], strides = [1, 1]} : vector<2x64xf32> to vector<2x16xf32>
    %112 = arith.mulf %109, %96 : vector<2x16xf32>
    %113 = arith.mulf %108, %110 : vector<2x16xf32>
    %114 = arith.addf %112, %113 : vector<2x16xf32>
    %115 = math.tanh %114 : vector<2x16xf32>
    %116 = arith.mulf %111, %115 : vector<2x16xf32>
    %117 = vector.extract_strided_slice %5 {offsets = [12, 0], sizes = [2, 64], strides = [1, 1]} : vector<16x64xf32> to vector<2x64xf32>
    %cst_21 = arith.constant dense<0.000000e+00> : vector<2x64xf32>
    %118 = tpu.matmul %116, %6, %cst_21 {dimension_numbers = #tpu.dot_dimension_numbers<[1], [0], [0], [1], [0, 0, 1, 1], [], []>} : vector<2x16xf32>, vector<16x64xf32>, vector<2x64xf32> -> vector<2x64xf32>
    %119 = arith.addf %117, %118 : vector<2x64xf32>
    %120 = arith.negf %119 : vector<2x64xf32>
    %121 = math.exp %120 : vector<2x64xf32>
    %cst_22 = arith.constant 1.000000e+00 : f32
    %122 = vector.broadcast %cst_22 : f32 to vector<2x64xf32>
    %123 = arith.addf %122, %121 : vector<2x64xf32>
    %124 = arith.divf %122, %123 : vector<2x64xf32>
    %125 = math.tanh %119 : vector<2x64xf32>
    %126 = vector.extract_strided_slice %124 {offsets = [0, 0], sizes = [2, 16], strides = [1, 1]} : vector<2x64xf32> to vector<2x16xf32>
    %127 = vector.extract_strided_slice %124 {offsets = [0, 16], sizes = [2, 16], strides = [1, 1]} : vector<2x64xf32> to vector<2x16xf32>
    %128 = vector.extract_strided_slice %125 {offsets = [0, 32], sizes = [2, 16], strides = [1, 1]} : vector<2x64xf32> to vector<2x16xf32>
    %129 = vector.extract_strided_slice %124 {offsets = [0, 48], sizes = [2, 16], strides = [1, 1]} : vector<2x64xf32> to vector<2x16xf32>
    %130 = arith.mulf %127, %114 : vector<2x16xf32>
    %131 = arith.mulf %126, %128 : vector<2x16xf32>
    %132 = arith.addf %130, %131 : vector<2x16xf32>
    %133 = math.tanh %132 : vector<2x16xf32>
    %134 = arith.mulf %129, %133 : vector<2x16xf32>
    %135 = vector.extract_strided_slice %5 {offsets = [14, 0], sizes = [2, 64], strides = [1, 1]} : vector<16x64xf32> to vector<2x64xf32>
    %cst_23 = arith.constant dense<0.000000e+00> : vector<2x64xf32>
    %136 = tpu.matmul %134, %6, %cst_23 {dimension_numbers = #tpu.dot_dimension_numbers<[1], [0], [0], [1], [0, 0, 1, 1], [], []>} : vector<2x16xf32>, vector<16x64xf32>, vector<2x64xf32> -> vector<2x64xf32>
    %137 = arith.addf %135, %136 : vector<2x64xf32>
    %138 = arith.negf %137 : vector<2x64xf32>
    %139 = math.exp %138 : vector<2x64xf32>
    %cst_24 = arith.constant 1.000000e+00 : f32
    %140 = vector.broadcast %cst_24 : f32 to vector<2x64xf32>
    %141 = arith.addf %140, %139 : vector<2x64xf32>
    %142 = arith.divf %140, %141 : vector<2x64xf32>
    %143 = math.tanh %137 : vector<2x64xf32>
    %144 = vector.extract_strided_slice %142 {offsets = [0, 0], sizes = [2, 16], strides = [1, 1]} : vector<2x64xf32> to vector<2x16xf32>
    %145 = vector.extract_strided_slice %142 {offsets = [0, 16], sizes = [2, 16], strides = [1, 1]} : vector<2x64xf32> to vector<2x16xf32>
    %146 = vector.extract_strided_slice %143 {offsets = [0, 32], sizes = [2, 16], strides = [1, 1]} : vector<2x64xf32> to vector<2x16xf32>
    %147 = vector.extract_strided_slice %142 {offsets = [0, 48], sizes = [2, 16], strides = [1, 1]} : vector<2x64xf32> to vector<2x16xf32>
    %148 = arith.mulf %145, %132 : vector<2x16xf32>
    %149 = arith.mulf %144, %146 : vector<2x16xf32>
    %150 = arith.addf %148, %149 : vector<2x16xf32>
    %151 = math.tanh %150 : vector<2x16xf32>
    %152 = arith.mulf %147, %151 : vector<2x16xf32>
    %cst_25 = arith.constant 0.000000e+00 : f32
    %153 = vector.broadcast %cst_25 : f32 to vector<2x16xf32>
    %154 = arith.maximumf %152, %153 : vector<2x16xf32>
    %155 = arith.truncf %154 : vector<2x16xf32> to vector<2x16xbf16>
    %c0_26 = arith.constant 0 : index
    %c0_27 = arith.constant 0 : index
    %156 = vector.load %arg4[%c0_26, %c0_27] : memref<16x1024xbf16, #tpu.memory_space<vmem>>, vector<16x1024xbf16>
    %cst_28 = arith.constant dense<0.000000e+00> : vector<2x1024xf32>
    %157 = tpu.matmul %155, %156, %cst_28 {dimension_numbers = #tpu.dot_dimension_numbers<[1], [0], [0], [1], [0, 0, 1, 1], [], []>} : vector<2x16xbf16>, vector<16x1024xbf16>, vector<2x1024xf32> -> vector<2x1024xf32>
    %c0_29 = arith.constant 0 : index
    %c0_30 = arith.constant 0 : index
    %158 = vector.load %arg5[%c0_29, %c0_30] : memref<1x1024xf32, #tpu.memory_space<vmem>>, vector<1x1024xf32>
    %159 = vector.broadcast %158 : vector<1x1024xf32> to vector<2x1024xf32>
    %160 = arith.addf %157, %159 : vector<2x1024xf32>
    %161 = arith.negf %160 : vector<2x1024xf32>
    %162 = math.exp %161 : vector<2x1024xf32>
    %cst_31 = arith.constant 1.000000e+00 : f32
    %163 = vector.broadcast %cst_31 : f32 to vector<2x1024xf32>
    %164 = arith.addf %163, %162 : vector<2x1024xf32>
    %165 = arith.divf %163, %164 : vector<2x1024xf32>
    %c0_32 = arith.constant 0 : index
    %c0_33 = arith.constant 0 : index
    %166 = vector.load %arg6[%c0_32, %c0_33] : memref<2x1024xf32, #tpu.memory_space<vmem>>, vector<2x1024xf32>
    tpu.vector_store %arg6[%c0_32, %c0_33], %165 {strides = array<i32>} : memref<2x1024xf32, #tpu.memory_space<vmem>>, vector<2x1024xf32>,
    return
  }
}

</mosaic_0001>

<llo_original>
// kernel: lstm_net_forward.1
$region0: #{lstm_net_forward.1}
  #allocation0 [shape = 'u32[]', space=smem, size = 0x4, offset = 0x4, fixed_abs, tag = 'smem constant byte address 0x4 - core index']
  #allocation1 [shape = 'u32[144,128]{1,0:T(1,128)}', space=vmem, size = 0x12000, scoped, tag = 'internal scratch']
  %s0 = inlined_call_operand.vmem [shape: bf16[16,904], index: 0, kind: input, shape index: {}]
  %s1 = inlined_call_operand.vmem [shape: bf16[904,64], index: 1, kind: input, shape index: {}]
  %s2 = inlined_call_operand.vmem [shape: f32[16,64], index: 2, kind: input, shape index: {}]
  %s3 = inlined_call_operand.vmem [shape: f32[1,64], index: 3, kind: input, shape index: {}]
  %s4 = inlined_call_operand.vmem [shape: bf16[16,1024], index: 4, kind: input, shape index: {}]
  %s5 = inlined_call_operand.vmem [shape: f32[1,1024], index: 5, kind: input, shape index: {}]
  %s6 = inlined_call_operand.hbm [shape: f32[2,1024], index: 6, kind: output, shape index: {}]
  %s7 = sld [smem:[#allocation0]]
  $region34: #{lstm_net_forward.1} parent=0
    _
  %s9 = ssub.s32 1, %s7
  %s10 = scalar_select 0, %s9, %s7
  $region1: #{lstm_net_forward.1} parent=0
    #allocation2 [shape = 'u8[8192]{0}', space=vmem, size = 0x2000, scoped, tag = 'output window, operand 0, single buffered']
    #allocation3 [shape = 's32[1]{0}', space=sflag, size = 0x4, scoped, tag = 'scoped memory for lstm_net_forward.1']
    %11 = vsyncpa [#allocation3], 0
    // Predicated region
    $region2: #{lstm_net_forward.1} parent=1 // pred_check
      _
    $region3: #{lstm_net_forward.1} parent=1 // pred_check_branch
      %13 = sbr.rel (0) target = $region5
    $region4: #{lstm_net_forward.1} parent=1 // pred_region
      _
    $region5: #{lstm_net_forward.1} parent=1 // pred_fallthru
      _
    // Predicated region
    $region6: #{lstm_net_forward.1} parent=1 // pred_check
      _
    $region7: #{lstm_net_forward.1} parent=1 // pred_check_branch
      %15 = sbr.rel (0) target = $region9
    $region8: #{lstm_net_forward.1} parent=1 // pred_region
      _
    $region9: #{lstm_net_forward.1} parent=1 // pred_fallthru
      _
    // Predicated region
    $region10: #{lstm_net_forward.1} parent=1 // pred_check
      _
    $region11: #{lstm_net_forward.1} parent=1 // pred_check_branch
      %17 = sbr.rel (0) target = $region13
    $region12: #{lstm_net_forward.1} parent=1 // pred_region
      _
    $region13: #{lstm_net_forward.1} parent=1 // pred_fallthru
      _
    // Predicated region
    $region14: #{lstm_net_forward.1} parent=1 // pred_check
      _
    $region15: #{lstm_net_forward.1} parent=1 // pred_check_branch
      %19 = sbr.rel (0) target = $region17
    $region16: #{lstm_net_forward.1} parent=1 // pred_region
      _
    $region17: #{lstm_net_forward.1} parent=1 // pred_fallthru
      _
    // Predicated region
    $region18: #{lstm_net_forward.1} parent=1 // pred_check
      _
    $region19: #{lstm_net_forward.1} parent=1 // pred_check_branch
      %21 = sbr.rel (0) target = $region21
    $region20: #{lstm_net_forward.1} parent=1 // pred_region
      _
    $region21: #{lstm_net_forward.1} parent=1 // pred_fallthru
      _
    // Predicated region
    $region22: #{lstm_net_forward.1} parent=1 // pred_check
      _
    $region23: #{lstm_net_forward.1} parent=1 // pred_check_branch
      %23 = sbr.rel (0) target = $region25
    $region24: #{lstm_net_forward.1} parent=1 // pred_region
      _
    $region25: #{lstm_net_forward.1} parent=1 // pred_fallthru
      _
    %v25 = vld [vmem:[%s0] sm:$0xff]
    %v26 = vld [vmem:[%s0 + $0x8] sm:$0xff]
    %v27 = vld [vmem:[%s0 + $0x10] sm:$0xff]
    %v28 = vld [vmem:[%s0 + $0x18] sm:$0xff]
    %v29 = vld [vmem:[%s0 + $0x20] sm:$0xff]
    %v30 = vld [vmem:[%s0 + $0x28] sm:$0xff]
    %v31 = vld [vmem:[%s0 + $0x30] sm:$0xff]
    %v32 = vld [vmem:[%s0 + $0x38] sm:$0xff]
    %v33 = vld [vmem:[%s1] sm:$0xf]
    %v34 = vld [vmem:[%s1 + $0x4] sm:$0xf]
    %v35 = vld [vmem:[%s1 + $0x8] sm:$0xf]
    %v36 = vld [vmem:[%s1 + $0xc] sm:$0xf]
    %v37 = vld [vmem:[%s1 + $0x10] sm:$0xf]
    %v38 = vld [vmem:[%s1 + $0x14] sm:$0xf]
    %v39 = vld [vmem:[%s1 + $0x18] sm:$0xf]
    %v40 = vld [vmem:[%s1 + $0x1c] sm:$0xf]
    %v41 = vld [vmem:[%s1 + $0x20] sm:$0xf]
    %v42 = vld [vmem:[%s1 + $0x24] sm:$0xf]
    %v43 = vld [vmem:[%s1 + $0x28] sm:$0xf]
    %v44 = vld [vmem:[%s1 + $0x2c] sm:$0xf]
    %v45 = vld [vmem:[%s1 + $0x30] sm:$0xf]
    %v46 = vld [vmem:[%s1 + $0x34] sm:$0xf]
    %v47 = vld [vmem:[%s1 + $0x38] sm:$0xf]
    %v48 = vld [vmem:[%s1 + $0x3c] sm:$0xf]
    %v49 = vld [vmem:[%s1 + $0x40] sm:$0xf]
    %v50 = vld [vmem:[%s1 + $0x44] sm:$0xf]
    %v51 = vld [vmem:[%s1 + $0x48] sm:$0xf]
    %v52 = vld [vmem:[%s1 + $0x4c] sm:$0xf]
    %v53 = vld [vmem:[%s1 + $0x50] sm:$0xf]
    %v54 = vld [vmem:[%s1 + $0x54] sm:$0xf]
    %v55 = vld [vmem:[%s1 + $0x58] sm:$0xf]
    %v56 = vld [vmem:[%s1 + $0x5c] sm:$0xf]
    %v57 = vld [vmem:[%s1 + $0x60] sm:$0xf]
    %v58 = vld [vmem:[%s1 + $0x64] sm:$0xf]
    %v59 = vld [vmem:[%s1 + $0x68] sm:$0xf]
    %v60 = vld [vmem:[%s1 + $0x6c] sm:$0xf]
    %v61 = vld [vmem:[%s1 + $0x70] sm:$0xf]
    %v62 = vld [vmem:[%s1 + $0x74] sm:$0xf]
    %v63 = vld [vmem:[%s1 + $0x78] sm:$0xf]
    %v64 = vld [vmem:[%s1 + $0x7c] sm:$0xf]
    %v65 = vld [vmem:[%s1 + $0x80] sm:$0xf]
    %v66 = vld [vmem:[%s1 + $0x84] sm:$0xf]
    %v67 = vld [vmem:[%s1 + $0x88] sm:$0xf]
    %v68 = vld [vmem:[%s1 + $0x8c] sm:$0xf]
    %v69 = vld [vmem:[%s1 + $0x90] sm:$0xf]
    %v70 = vld [vmem:[%s1 + $0x94] sm:$0xf]
    %v71 = vld [vmem:[%s1 + $0x98] sm:$0xf]
    %v72 = vld [vmem:[%s1 + $0x9c] sm:$0xf]
    %v73 = vld [vmem:[%s1 + $0xa0] sm:$0xf]
    %v74 = vld [vmem:[%s1 + $0xa4] sm:$0xf]
    %v75 = vld [vmem:[%s1 + $0xa8] sm:$0xf]
    %v76 = vld [vmem:[%s1 + $0xac] sm:$0xf]
    %v77 = vld [vmem:[%s1 + $0xb0] sm:$0xf]
    %v78 = vld [vmem:[%s1 + $0xb4] sm:$0xf]
    %v79 = vld [vmem:[%s1 + $0xb8] sm:$0xf]
    %v80 = vld [vmem:[%s1 + $0xbc] sm:$0xf]
    %v81 = vld [vmem:[%s1 + $0xc0] sm:$0xf]
    %v82 = vld [vmem:[%s1 + $0xc4] sm:$0xf]
    %v83 = vld [vmem:[%s1 + $0xc8] sm:$0xf]
    %v84 = vld [vmem:[%s1 + $0xcc] sm:$0xf]
    %v85 = vld [vmem:[%s1 + $0xd0] sm:$0xf]
    %v86 = vld [vmem:[%s1 + $0xd4] sm:$0xf]
    %v87 = vld [vmem:[%s1 + $0xd8] sm:$0xf]
    %v88 = vld [vmem:[%s1 + $0xdc] sm:$0xf]
    %v89 = vld [vmem:[%s1 + $0xe0] sm:$0xf]
    %v90 = vld [vmem:[%s1 + $0xe4] sm:$0xf]
    %v91 = vld [vmem:[%s1 + $0xe8] sm:$0xf]
    %v92 = vld [vmem:[%s1 + $0xec] sm:$0xf]
    %v93 = vld [vmem:[%s1 + $0xf0] sm:$0xf]
    %v94 = vld [vmem:[%s1 + $0xf4] sm:$0xf]
    %v95 = vld [vmem:[%s1 + $0xf8] sm:$0xf]
    %v96 = vld [vmem:[%s1 + $0xfc] sm:$0xf]
    %v97 = vld [vmem:[%s1 + $0x100] sm:$0xf]
    %v98 = vld [vmem:[%s1 + $0x104] sm:$0xf]
    %v99 = vld [vmem:[%s1 + $0x108] sm:$0xf]
    %v100 = vld [vmem:[%s1 + $0x10c] sm:$0xf]
    %v101 = vld [vmem:[%s1 + $0x110] sm:$0xf]
    %v102 = vld [vmem:[%s1 + $0x114] sm:$0xf]
    %v103 = vld [vmem:[%s1 + $0x118] sm:$0xf]
    %v104 = vld [vmem:[%s1 + $0x11c] sm:$0xf]
    %v105 = vld [vmem:[%s1 + $0x120] sm:$0xf]
    %v106 = vld [vmem:[%s1 + $0x124] sm:$0xf]
    %v107 = vld [vmem:[%s1 + $0x128] sm:$0xf]
    %v108 = vld [vmem:[%s1 + $0x12c] sm:$0xf]
    %v109 = vld [vmem:[%s1 + $0x130] sm:$0xf]
    %v110 = vld [vmem:[%s1 + $0x134] sm:$0xf]
    %v111 = vld [vmem:[%s1 + $0x138] sm:$0xf]
    %v112 = vld [vmem:[%s1 + $0x13c] sm:$0xf]
    %v113 = vld [vmem:[%s1 + $0x140] sm:$0xf]
    %v114 = vld [vmem:[%s1 + $0x144] sm:$0xf]
    %v115 = vld [vmem:[%s1 + $0x148] sm:$0xf]
    %v116 = vld [vmem:[%s1 + $0x14c] sm:$0xf]
    %v117 = vld [vmem:[%s1 + $0x150] sm:$0xf]
    %v118 = vld [vmem:[%s1 + $0x154] sm:$0xf]
    %v119 = vld [vmem:[%s1 + $0x158] sm:$0xf]
    %v120 = vld [vmem:[%s1 + $0x15c] sm:$0xf]
    %v121 = vld [vmem:[%s1 + $0x160] sm:$0xf]
    %v122 = vld [vmem:[%s1 + $0x164] sm:$0xf]
    %v123 = vld [vmem:[%s1 + $0x168] sm:$0xf]
    %v124 = vld [vmem:[%s1 + $0x16c] sm:$0xf]
    %v125 = vld [vmem:[%s1 + $0x170] sm:$0xf]
    %v126 = vld [vmem:[%s1 + $0x174] sm:$0xf]
    %v127 = vld [vmem:[%s1 + $0x178] sm:$0xf]
    %v128 = vld [vmem:[%s1 + $0x17c] sm:$0xf]
    %v129 = vld [vmem:[%s1 + $0x180] sm:$0xf]
    %v130 = vld [vmem:[%s1 + $0x184] sm:$0xf]
    %v131 = vld [vmem:[%s1 + $0x188] sm:$0xf]
    %v132 = vld [vmem:[%s1 + $0x18c] sm:$0xf]
    %v133 = vld [vmem:[%s1 + $0x190] sm:$0xf]
    %v134 = vld [vmem:[%s1 + $0x194] sm:$0xf]
    %v135 = vld [vmem:[%s1 + $0x198] sm:$0xf]
    %v136 = vld [vmem:[%s1 + $0x19c] sm:$0xf]
    %v137 = vld [vmem:[%s1 + $0x1a0] sm:$0xf]
    %v138 = vld [vmem:[%s1 + $0x1a4] sm:$0xf]
    %v139 = vld [vmem:[%s1 + $0x1a8] sm:$0xf]
    %v140 = vld [vmem:[%s1 + $0x1ac] sm:$0xf]
    %v141 = vld [vmem:[%s1 + $0x1b0] sm:$0xf]
    %v142 = vld [vmem:[%s1 + $0x1b4] sm:$0xf]
    %v143 = vld [vmem:[%s1 + $0x1b8] sm:$0xf]
    %v144 = vld [vmem:[%s1 + $0x1bc] sm:$0xf]
    %v145 = vld [vmem:[%s1 + $0x1c0] sm:$0xf]
    %v146 = vld [vmem:[%s3] sm:$0x1]
    %v148 = vlaneseq
    %v149 = vshrl.u32 %v148, 7
    %v150 = vsub.s32 0, %v149
    %v151 = vrot.slane %v146, %v150
    %v161 = vunpack.c.l.b16 %v25
    %v162 = vunpack.c.h.b16 %v25
    %v163 = vunpack.c.l.b16 %v26
    %v164 = vunpack.c.h.b16 %v26
    %v165 = vunpack.c.l.b16 %v27
    %v166 = vunpack.c.h.b16 %v27
    %v167 = vunpack.c.l.b16 %v28
    %v168 = vunpack.c.h.b16 %v28
    %v169 = vunpack.c.l.b16 %v29
    %v170 = vunpack.c.h.b16 %v29
    %v171 = vunpack.c.l.b16 %v30
    %v172 = vunpack.c.h.b16 %v30
    %v173 = vunpack.c.l.b16 %v31
    %v174 = vunpack.c.h.b16 %v31
    %v175 = vunpack.c.l.b16 %v32
    %v176 = vunpack.c.h.b16 %v32
    %v177 = vpack.c.b16 %v169, %v161
    %v178 = vpack.c.b16 %v170, %v162
    %v179 = vpack.c.b16 %v171, %v163
    %v180 = vpack.c.b16 %v172, %v164
    %v181 = vpack.c.b16 %v173, %v165
    %v182 = vpack.c.b16 %v174, %v166
    %v183 = vpack.c.b16 %v175, %v167
    %v184 = vpack.c.b16 %v176, %v168
    %v305 = vunpack.c.l.b16 %v33
    %v306 = vunpack.c.l.b16 %v34
    %v307 = vunpack.c.l.b16 %v35
    %v308 = vunpack.c.l.b16 %v36
    %v309 = vunpack.c.l.b16 %v37
    %v310 = vunpack.c.l.b16 %v38
    %v311 = vunpack.c.l.b16 %v39
    %v312 = vunpack.c.l.b16 %v40
    %v313 = vunpack.c.l.b16 %v41
    %v314 = vunpack.c.l.b16 %v42
    %v315 = vunpack.c.l.b16 %v43
    %v316 = vunpack.c.l.b16 %v44
    %v317 = vunpack.c.l.b16 %v45
    %v318 = vunpack.c.l.b16 %v46
    %v319 = vunpack.c.l.b16 %v47
    %v320 = vunpack.c.l.b16 %v48
    %v321 = vunpack.c.l.b16 %v49
    %v322 = vunpack.c.l.b16 %v50
    %v323 = vunpack.c.l.b16 %v51
    %v324 = vunpack.c.l.b16 %v52
    %v325 = vunpack.c.l.b16 %v53
    %v326 = vunpack.c.l.b16 %v54
    %v327 = vunpack.c.l.b16 %v55
    %v328 = vunpack.c.l.b16 %v56
    %v329 = vunpack.c.l.b16 %v57
    %v330 = vunpack.c.l.b16 %v58
    %v331 = vunpack.c.l.b16 %v59
    %v332 = vunpack.c.l.b16 %v60
    %v333 = vunpack.c.l.b16 %v61
    %v334 = vunpack.c.l.b16 %v62
    %v335 = vunpack.c.l.b16 %v63
    %v336 = vunpack.c.l.b16 %v64
    %v337 = vunpack.c.l.b16 %v65
    %v338 = vunpack.c.l.b16 %v66
    %v339 = vunpack.c.l.b16 %v67
    %v340 = vunpack.c.l.b16 %v68
    %v341 = vunpack.c.l.b16 %v69
    %v342 = vunpack.c.l.b16 %v70
    %v343 = vunpack.c.l.b16 %v71
    %v344 = vunpack.c.l.b16 %v72
    %v345 = vunpack.c.l.b16 %v73
    %v346 = vunpack.c.l.b16 %v74
    %v347 = vunpack.c.l.b16 %v75
    %v348 = vunpack.c.l.b16 %v76
    %v349 = vunpack.c.l.b16 %v77
    %v350 = vunpack.c.l.b16 %v78
    %v351 = vunpack.c.l.b16 %v79
    %v352 = vunpack.c.l.b16 %v80
    %v353 = vunpack.c.l.b16 %v81
    %v354 = vunpack.c.l.b16 %v82
    %v355 = vunpack.c.l.b16 %v83
    %v356 = vunpack.c.l.b16 %v84
    %v357 = vunpack.c.l.b16 %v85
    %v358 = vunpack.c.l.b16 %v86
    %v359 = vunpack.c.l.b16 %v87
    %v360 = vunpack.c.l.b16 %v88
    %v361 = vunpack.c.l.b16 %v89
    %v362 = vunpack.c.l.b16 %v90
    %v363 = vunpack.c.l.b16 %v91
    %v364 = vunpack.c.l.b16 %v92
    %v365 = vunpack.c.l.b16 %v93
    %v366 = vunpack.c.l.b16 %v94
    %v367 = vunpack.c.l.b16 %v95
    %v368 = vunpack.c.l.b16 %v96
    %v369 = vunpack.c.l.b16 %v97
    %v370 = vunpack.c.l.b16 %v98
    %v371 = vunpack.c.l.b16 %v99
    %v372 = vunpack.c.l.b16 %v100
    %v373 = vunpack.c.l.b16 %v101
    %v374 = vunpack.c.l.b16 %v102
    %v375 = vunpack.c.l.b16 %v103
    %v376 = vunpack.c.l.b16 %v104
    %v377 = vunpack.c.l.b16 %v105
    %v378 = vunpack.c.l.b16 %v106
    %v379 = vunpack.c.l.b16 %v107
    %v380 = vunpack.c.l.b16 %v108
    %v381 = vunpack.c.l.b16 %v109
    %v382 = vunpack.c.l.b16 %v110
    %v383 = vunpack.c.l.b16 %v111
    %v384 = vunpack.c.l.b16 %v112
    %v385 = vunpack.c.l.b16 %v113
    %v386 = vunpack.c.l.b16 %v114
    %v387 = vunpack.c.l.b16 %v115
    %v388 = vunpack.c.l.b16 %v116
    %v389 = vunpack.c.l.b16 %v117
    %v390 = vunpack.c.l.b16 %v118
    %v391 = vunpack.c.l.b16 %v119
    %v392 = vunpack.c.l.b16 %v120
    %v393 = vunpack.c.l.b16 %v121
    %v394 = vunpack.c.l.b16 %v122
    %v395 = vunpack.c.l.b16 %v123
    %v396 = vunpack.c.l.b16 %v124
    %v397 = vunpack.c.l.b16 %v125
    %v398 = vunpack.c.l.b16 %v126
    %v399 = vunpack.c.l.b16 %v127
    %v400 = vunpack.c.l.b16 %v128
    %v401 = vunpack.c.l.b16 %v129
    %v402 = vunpack.c.l.b16 %v130
    %v403 = vunpack.c.l.b16 %v131
    %v404 = vunpack.c.l.b16 %v132
    %v405 = vunpack.c.l.b16 %v133
    %v406 = vunpack.c.l.b16 %v134
    %v407 = vunpack.c.l.b16 %v135
    %v408 = vunpack.c.l.b16 %v136
    %v409 = vunpack.c.l.b16 %v137
    %v410 = vunpack.c.l.b16 %v138
    %v411 = vunpack.c.l.b16 %v139
    %v412 = vunpack.c.l.b16 %v140
    %v413 = vunpack.c.l.b16 %v141
    %v414 = vunpack.c.l.b16 %v142
    %v415 = vunpack.c.l.b16 %v143
    %v416 = vunpack.c.l.b16 %v144
    %v417 = vunpack.c.l.b16 %v145
    %v418 = vpack.c.b16 %v306, %v305
    %v419 = vpack.c.b16 %v308, %v307
    %v420 = vpack.c.b16 %v310, %v309
    %v421 = vpack.c.b16 %v312, %v311
    %v422 = vpack.c.b16 %v314, %v313
    %v423 = vpack.c.b16 %v316, %v315
    %v424 = vpack.c.b16 %v318, %v317
    %v425 = vpack.c.b16 %v320, %v319
    %v426 = vpack.c.b16 %v322, %v321
    %v427 = vpack.c.b16 %v324, %v323
    %v428 = vpack.c.b16 %v326, %v325
    %v429 = vpack.c.b16 %v328, %v327
    %v430 = vpack.c.b16 %v330, %v329
    %v431 = vpack.c.b16 %v332, %v331
    %v432 = vpack.c.b16 %v334, %v333
    %v433 = vpack.c.b16 %v336, %v335
    %v434 = vpack.c.b16 %v338, %v337
    %v435 = vpack.c.b16 %v340, %v339
    %v436 = vpack.c.b16 %v342, %v341
    %v437 = vpack.c.b16 %v344, %v343
    %v438 = vpack.c.b16 %v346, %v345
    %v439 = vpack.c.b16 %v348, %v347
    %v440 = vpack.c.b16 %v350, %v349
    %v441 = vpack.c.b16 %v352, %v351
    %v442 = vpack.c.b16 %v354, %v353
    %v443 = vpack.c.b16 %v356, %v355
    %v444 = vpack.c.b16 %v358, %v357
    %v445 = vpack.c.b16 %v360, %v359
    %v446 = vpack.c.b16 %v362, %v361
    %v447 = vpack.c.b16 %v364, %v363
    %v448 = vpack.c.b16 %v366, %v365
    %v449 = vpack.c.b16 %v368, %v367
    %v450 = vpack.c.b16 %v370, %v369
    %v451 = vpack.c.b16 %v372, %v371
    %v452 = vpack.c.b16 %v374, %v373
    %v453 = vpack.c.b16 %v376, %v375
    %v454 = vpack.c.b16 %v378, %v377
    %v455 = vpack.c.b16 %v380, %v379
    %v456 = vpack.c.b16 %v382, %v381
    %v457 = vpack.c.b16 %v384, %v383
    %v458 = vpack.c.b16 %v386, %v385
    %v459 = vpack.c.b16 %v388, %v387
    %v460 = vpack.c.b16 %v390, %v389
    %v461 = vpack.c.b16 %v392, %v391
    %v462 = vpack.c.b16 %v394, %v393
    %v463 = vpack.c.b16 %v396, %v395
    %v464 = vpack.c.b16 %v398, %v397
    %v465 = vpack.c.b16 %v400, %v399
    %v466 = vpack.c.b16 %v402, %v401
    %v467 = vpack.c.b16 %v404, %v403
    %v468 = vpack.c.b16 %v406, %v405
    %v469 = vpack.c.b16 %v408, %v407
    %v470 = vpack.c.b16 %v410, %v409
    %v471 = vpack.c.b16 %v412, %v411
    %v472 = vpack.c.b16 %v414, %v413
    %v473 = vpack.c.b16 %v416, %v415
    %v474 = vpack.c.b16 %v417, %v417
    %vm531 = vcmask 64512
    %v533 = vsel %vm531, %v184, 0
    %vm535 = vcmask 1043456
    %v537 = vsel %vm535, %v474, 0
    %539 = vmatprep.subr.bf16.mxu0 0
    %540 = vmatpush1.bf16.msra.mxu0 %v418
    %541 = vmatprep.subr.bf16.mxu0 0
    %542 = vmatpush1.bf16.msra.mxu0 %v419
    %543 = vmatprep.subr.bf16.mxu0 0
    %544 = vmatpush1.bf16.msra.mxu0 %v420
    %545 = vmatprep.subr.bf16.mxu0 0
    %546 = vmatpush1.bf16.msra.mxu0 %v421
    %547 = vmatprep.subr.bf16.mxu0 0
    %548 = vmatpush1.bf16.msra.mxu0 %v422
    %549 = vmatprep.subr.bf16.mxu0 0
    %550 = vmatpush1.bf16.msra.mxu0 %v423
    %551 = vmatprep.subr.bf16.mxu0 0
    %552 = vmatpush1.bf16.msra.mxu0 %v424
    %553 = vmatprep.subr.bf16.mxu0 0
    %554 = vmatpush1.bf16.msra.mxu0 %v425
    %555 = vmatprep.subr.bf16.mxu0 0
    %556 = vmatpush1.bf16.msra.mxu0 %v426
    %557 = vmatprep.subr.bf16.mxu0 0
    %558 = vmatpush1.bf16.msra.mxu0 %v427
    %559 = vmatprep.subr.bf16.mxu0 0
    %560 = vmatpush1.bf16.msra.mxu0 %v428
    %561 = vmatprep.subr.bf16.mxu0 0
    %562 = vmatpush1.bf16.msra.mxu0 %v429
    %563 = vmatprep.subr.bf16.mxu0 0
    %564 = vmatpush1.bf16.msra.mxu0 %v430
    %565 = vmatprep.subr.bf16.mxu0 0
    %566 = vmatpush1.bf16.msra.mxu0 %v431
    %567 = vmatprep.subr.bf16.mxu0 0
    %568 = vmatpush1.bf16.msra.mxu0 %v432
    %569 = vmatprep.subr.bf16.mxu0 0
    %570 = vmatpush1.bf16.msra.mxu0 %v433
    %571 = vmatprep.mubr.bf16.mxu0 %v178
    %572 = vmatmul.mubr.bf16.gmra.mrb[0].mxu0 %v177
    %v573 = vpop.f32.mrb[0].mxu0
    %v574 = vadd.f32 %v151, %v573
    %v575 = vpop.f32.mrb[0].mxu0
    %v576 = vpop.f32.mrb[0].mxu0
    %v577 = vadd.f32 %v151, %v576
    %v578 = vpop.f32.mrb[0].mxu0
    %579 = vdwg.mxu0
    %580 = vmatprep.subr.bf16.mxu0 0
    %581 = vmatpush1.bf16.msra.mxu0 %v434
    %582 = vmatprep.subr.bf16.mxu0 0
    %583 = vmatpush1.bf16.msra.mxu0 %v435
    %584 = vmatprep.subr.bf16.mxu0 0
    %585 = vmatpush1.bf16.msra.mxu0 %v436
    %586 = vmatprep.subr.bf16.mxu0 0
    %587 = vmatpush1.bf16.msra.mxu0 %v437
    %588 = vmatprep.subr.bf16.mxu0 0
    %589 = vmatpush1.bf16.msra.mxu0 %v438
    %590 = vmatprep.subr.bf16.mxu0 0
    %591 = vmatpush1.bf16.msra.mxu0 %v439
    %592 = vmatprep.subr.bf16.mxu0 0
    %593 = vmatpush1.bf16.msra.mxu0 %v440
    %594 = vmatprep.subr.bf16.mxu0 0
    %595 = vmatpush1.bf16.msra.mxu0 %v441
    %596 = vmatprep.subr.bf16.mxu0 0
    %597 = vmatpush1.bf16.msra.mxu0 %v442
    %598 = vmatprep.subr.bf16.mxu0 0
    %599 = vmatpush1.bf16.msra.mxu0 %v443
    %600 = vmatprep.subr.bf16.mxu0 0
    %601 = vmatpush1.bf16.msra.mxu0 %v444
    %602 = vmatprep.subr.bf16.mxu0 0
    %603 = vmatpush1.bf16.msra.mxu0 %v445
    %604 = vmatprep.subr.bf16.mxu0 0
    %605 = vmatpush1.bf16.msra.mxu0 %v446
    %606 = vmatprep.subr.bf16.mxu0 0
    %607 = vmatpush1.bf16.msra.mxu0 %v447
    %608 = vmatprep.subr.bf16.mxu0 0
    %609 = vmatpush1.bf16.msra.mxu0 %v448
    %610 = vmatprep.subr.bf16.mxu0 0
    %611 = vmatpush1.bf16.msra.mxu0 %v449
    %612 = vmatprep.mubr.bf16.mxu0 %v180
    %613 = vmatmul.mubr.bf16.gmra.mrb[0].mxu0 %v179
    %v614 = vpop.f32.mrb[0].mxu0
    %v615 = vadd.f32 %v574, %v614
    %v616 = vpop.f32.mrb[0].mxu0
    %v617 = vpop.f32.mrb[0].mxu0
    %v618 = vadd.f32 %v577, %v617
    %v619 = vpop.f32.mrb[0].mxu0
    %620 = vdwg.mxu0
    %621 = vmatprep.subr.bf16.mxu0 0
    %622 = vmatpush1.bf16.msra.mxu0 %v450
    %623 = vmatprep.subr.bf16.mxu0 0
    %624 = vmatpush1.bf16.msra.mxu0 %v451
    %625 = vmatprep.subr.bf16.mxu0 0
    %626 = vmatpush1.bf16.msra.mxu0 %v452
    %627 = vmatprep.subr.bf16.mxu0 0
    %628 = vmatpush1.bf16.msra.mxu0 %v453
    %629 = vmatprep.subr.bf16.mxu0 0
    %630 = vmatpush1.bf16.msra.mxu0 %v454
    %631 = vmatprep.subr.bf16.mxu0 0
    %632 = vmatpush1.bf16.msra.mxu0 %v455
    %633 = vmatprep.subr.bf16.mxu0 0
    %634 = vmatpush1.bf16.msra.mxu0 %v456
    %635 = vmatprep.subr.bf16.mxu0 0
    %636 = vmatpush1.bf16.msra.mxu0 %v457
    %637 = vmatprep.subr.bf16.mxu0 0
    %638 = vmatpush1.bf16.msra.mxu0 %v458
    %639 = vmatprep.subr.bf16.mxu0 0
    %640 = vmatpush1.bf16.msra.mxu0 %v459
    %641 = vmatprep.subr.bf16.mxu0 0
    %642 = vmatpush1.bf16.msra.mxu0 %v460
    %643 = vmatprep.subr.bf16.mxu0 0
    %644 = vmatpush1.bf16.msra.mxu0 %v461
    %645 = vmatprep.subr.bf16.mxu0 0
    %646 = vmatpush1.bf16.msra.mxu0 %v462
    %647 = vmatprep.subr.bf16.mxu0 0
    %648 = vmatpush1.bf16.msra.mxu0 %v463
    %649 = vmatprep.subr.bf16.mxu0 0
    %650 = vmatpush1.bf16.msra.mxu0 %v464
    %651 = vmatprep.subr.bf16.mxu0 0
    %652 = vmatpush1.bf16.msra.mxu0 %v465
    %653 = vmatprep.mubr.bf16.mxu0 %v182
    %654 = vmatmul.mubr.bf16.gmra.mrb[0].mxu0 %v181
    %v655 = vpop.f32.mrb[0].mxu0
    %v656 = vadd.f32 %v615, %v655
    %v657 = vpop.f32.mrb[0].mxu0
    %v658 = vpop.f32.mrb[0].mxu0
    %v659 = vadd.f32 %v618, %v658
    %v660 = vpop.f32.mrb[0].mxu0
    %661 = vdwg.mxu0
    %662 = vmatprep.subr.bf16.mxu0 0
    %663 = vmatpush1.bf16.msra.mxu0 %v466
    %664 = vmatprep.subr.bf16.mxu0 0
    %665 = vmatpush1.bf16.msra.mxu0 %v467
    %666 = vmatprep.subr.bf16.mxu0 0
    %667 = vmatpush1.bf16.msra.mxu0 %v468
    %668 = vmatprep.subr.bf16.mxu0 0
    %669 = vmatpush1.bf16.msra.mxu0 %v469
    %670 = vmatprep.subr.bf16.mxu0 0
    %671 = vmatpush1.bf16.msra.mxu0 %v470
    %672 = vmatprep.subr.bf16.mxu0 0
    %673 = vmatpush1.bf16.msra.mxu0 %v471
    %674 = vmatprep.subr.bf16.mxu0 0
    %675 = vmatpush1.bf16.msra.mxu0 %v472
    %676 = vmatprep.subr.bf16.mxu0 0
    %677 = vmatpush1.bf16.msra.mxu0 %v473
    %678 = vmatprep.subr.bf16.mxu0 0
    %679 = vmatpush1.bf16.msra.mxu0 %v537
    %680 = vmatprep.subr.bf16.mxu0 0
    %681 = vmatpush1.bf16.msra.mxu0 0
    %682 = vmatprep.subr.bf16.mxu0 0
    %683 = vmatpush1.bf16.msra.mxu0 0
    %684 = vmatprep.subr.bf16.mxu0 0
    %685 = vmatpush1.bf16.msra.mxu0 0
    %686 = vmatprep.subr.bf16.mxu0 0
    %687 = vmatpush1.bf16.msra.mxu0 0
    %688 = vmatprep.subr.bf16.mxu0 0
    %689 = vmatpush1.bf16.msra.mxu0 0
    %690 = vmatprep.subr.bf16.mxu0 0
    %691 = vmatpush1.bf16.msra.mxu0 0
    %692 = vmatprep.subr.bf16.mxu0 0
    %693 = vmatpush1.bf16.msra.mxu0 0
    %694 = vmatprep.mubr.bf16.mxu0 %v533
    %695 = vmatmul.mubr.bf16.gmra.mrb[0].mxu0 %v183
    %v696 = vpop.f32.mrb[0].mxu0
    %v697 = vadd.f32 %v656, %v696
    %v698 = vpop.f32.mrb[0].mxu0
    %v699 = vpop.f32.mrb[0].mxu0
    %v700 = vadd.f32 %v659, %v699
    %v701 = vpop.f32.mrb[0].mxu0
    %702 = vdwg.mxu0
    %v703 = vld [vmem:[%s2] sm:$0xff]
    %v704 = vld [vmem:[%s2 + $0x8] sm:$0xff]
    %vm705 = vcmask 130048
    %v707 = vsel %vm705, 0.0, 0
    %709 = vmatprep.subr.mxu0 0.0
    %710 = vmatpush1.msra.mxu0 %v703
    %711 = vmatprep.subr.mxu0 0.0
    %712 = vmatpush1.msra.mxu0 %v704
    %713 = vmatprep.subr.mxu0 0.0
    %714 = vmatpush1.msra.mxu0 0.0
    %715 = vmatprep.subr.mxu0 0.0
    %716 = vmatpush1.msra.mxu0 0.0
    %717 = vmatprep.subr.mxu0 0.0
    %718 = vmatpush1.msra.mxu0 0.0
    %719 = vmatprep.subr.mxu0 0.0
    %720 = vmatpush1.msra.mxu0 0.0
    %721 = vmatprep.subr.mxu0 0.0
    %722 = vmatpush1.msra.mxu0 0.0
    %723 = vmatprep.subr.mxu0 0.0
    %724 = vmatpush1.msra.mxu0 0.0
    %725 = vmatprep.subr.mxu0 0.0
    %726 = vmatpush1.msra.mxu0 0.0
    %727 = vmatprep.subr.mxu0 0.0
    %728 = vmatpush1.msra.mxu0 0.0
    %729 = vmatprep.subr.mxu0 0.0
    %730 = vmatpush1.msra.mxu0 0.0
    %731 = vmatprep.subr.mxu0 0.0
    %732 = vmatpush1.msra.mxu0 0.0
    %733 = vmatprep.subr.mxu0 0.0
    %734 = vmatpush1.msra.mxu0 0.0
    %735 = vmatprep.subr.mxu0 0.0
    %736 = vmatpush1.msra.mxu0 0.0
    %737 = vmatprep.subr.mxu0 0.0
    %738 = vmatpush1.msra.mxu0 0.0
    %739 = vmatprep.subr.mxu0 0.0
    %740 = vmatpush1.msra.mxu0 0.0
    %741 = vmatprep.subr.mxu0 0.0
    %742 = vmatpush1.msra.mxu0 0.0
    %743 = vmatprep.subr.mxu0 0.0
    %744 = vmatpush1.msra.mxu0 0.0
    %745 = vmatprep.subr.mxu0 0.0
    %746 = vmatpush1.msra.mxu0 0.0
    %747 = vmatprep.subr.mxu0 0.0
    %748 = vmatpush1.msra.mxu0 0.0
    %749 = vmatprep.subr.mxu0 0.0
    %750 = vmatpush1.msra.mxu0 0.0
    %751 = vmatprep.subr.mxu0 0.0
    %752 = vmatpush1.msra.mxu0 0.0
    %753 = vmatprep.subr.mxu0 0.0
    %754 = vmatpush1.msra.mxu0 0.0
    %755 = vmatprep.subr.mxu0 0.0
    %756 = vmatpush1.msra.mxu0 0.0
    %757 = vmatprep.subr.mxu0 0.0
    %758 = vmatpush1.msra.mxu0 0.0
    %759 = vmatprep.subr.mxu0 0.0
    %760 = vmatpush1.msra.mxu0 0.0
    %761 = vmatprep.subr.mxu0 0.0
    %762 = vmatpush1.msra.mxu0 0.0
    %763 = vmatprep.subr.mxu0 0.0
    %764 = vmatpush1.msra.mxu0 0.0
    %765 = vmatprep.subr.mxu0 0.0
    %766 = vmatpush1.msra.mxu0 0.0
    %767 = vmatprep.subr.mxu0 0.0
    %768 = vmatpush1.msra.mxu0 0.0
    %769 = vmatprep.subr.mxu0 0.0
    %770 = vmatpush1.msra.mxu0 0.0
    %771 = vmatprep.subr.mxu0 0.0
    %772 = vmatpush1.msra.mxu0 0.0
    %773 = vmatprep.mubr.f32.mxu0 0.0
    %774 = vmatmul.mubr.f32.gmra.mrb[0].mxu0 %v707
    %v775 = vpop.f32.mrb[0].mxu0
    %v776 = vadd.f32 0.0, %v775
    %v777 = vpop.f32.mrb[0].mxu0
    %778 = vdwg.mxu0
    %v779 = vadd.f32 %v697, %v776
    %v780 = vxor.u32 %v779, 2147483648
    %v781 = vmul.f32 %v780, 1.442695
    %v782 = vpow.pop %v781
    %v783 = vadd.f32 %v782, 1.0
    %v784 = vrcp.pop %v783
    %v785 = vmul.f32 1.0, %v784
    %v786 = vtanh.pop %v779
    %v787 = vmul.f32 %v785, 0.0
    %789 = vrot.lane.b32.xlu0 %v786, 96
    %v790 = vpop.permute.xlu0 %789
    %v792 = vmul.f32 %v785, %v790
    %794 = vrot.lane.b32.xlu0 %v792, 16
    %v795 = vpop.permute.xlu0 %794
    %v797 = vadd.f32 %v787, %v795
    %v798 = vtanh.pop %v797
    %800 = vrot.lane.b32.xlu0 %v798, 32
    %v801 = vpop.permute.xlu0 %800
    %v803 = vmul.f32 %v785, %v801
    %805 = vrot.lane.b32.xlu0 %v803, 80
    %v806 = vpop.permute.xlu0 %805
    %v807 = vsel %vm705, %v806, 0
    %809 = vmatprep.subr.mxu0 0.0
    %810 = vmatpush1.msra.mxu0 %v703
    %811 = vmatprep.subr.mxu0 0.0
    %812 = vmatpush1.msra.mxu0 %v704
    %813 = vmatprep.subr.mxu0 0.0
    %814 = vmatpush1.msra.mxu0 0.0
    %815 = vmatprep.subr.mxu0 0.0
    %816 = vmatpush1.msra.mxu0 0.0
    %817 = vmatprep.subr.mxu0 0.0
    %818 = vmatpush1.msra.mxu0 0.0
    %819 = vmatprep.subr.mxu0 0.0
    %820 = vmatpush1.msra.mxu0 0.0
    %821 = vmatprep.subr.mxu0 0.0
    %822 = vmatpush1.msra.mxu0 0.0
    %823 = vmatprep.subr.mxu0 0.0
    %824 = vmatpush1.msra.mxu0 0.0
    %825 = vmatprep.subr.mxu0 0.0
    %826 = vmatpush1.msra.mxu0 0.0
    %827 = vmatprep.subr.mxu0 0.0
    %828 = vmatpush1.msra.mxu0 0.0
    %829 = vmatprep.subr.mxu0 0.0
    %830 = vmatpush1.msra.mxu0 0.0
    %831 = vmatprep.subr.mxu0 0.0
    %832 = vmatpush1.msra.mxu0 0.0
    %833 = vmatprep.subr.mxu0 0.0
    %834 = vmatpush1.msra.mxu0 0.0
    %835 = vmatprep.subr.mxu0 0.0
    %836 = vmatpush1.msra.mxu0 0.0
    %837 = vmatprep.subr.mxu0 0.0
    %838 = vmatpush1.msra.mxu0 0.0
    %839 = vmatprep.subr.mxu0 0.0
    %840 = vmatpush1.msra.mxu0 0.0
    %841 = vmatprep.subr.mxu0 0.0
    %842 = vmatpush1.msra.mxu0 0.0
    %843 = vmatprep.subr.mxu0 0.0
    %844 = vmatpush1.msra.mxu0 0.0
    %845 = vmatprep.subr.mxu0 0.0
    %846 = vmatpush1.msra.mxu0 0.0
    %847 = vmatprep.subr.mxu0 0.0
    %848 = vmatpush1.msra.mxu0 0.0
    %849 = vmatprep.subr.mxu0 0.0
    %850 = vmatpush1.msra.mxu0 0.0
    %851 = vmatprep.subr.mxu0 0.0
    %852 = vmatpush1.msra.mxu0 0.0
    %853 = vmatprep.subr.mxu0 0.0
    %854 = vmatpush1.msra.mxu0 0.0
    %855 = vmatprep.subr.mxu0 0.0
    %856 = vmatpush1.msra.mxu0 0.0
    %857 = vmatprep.subr.mxu0 0.0
    %858 = vmatpush1.msra.mxu0 0.0
    %859 = vmatprep.subr.mxu0 0.0
    %860 = vmatpush1.msra.mxu0 0.0
    %861 = vmatprep.subr.mxu0 0.0
    %862 = vmatpush1.msra.mxu0 0.0
    %863 = vmatprep.subr.mxu0 0.0
    %864 = vmatpush1.msra.mxu0 0.0
    %865 = vmatprep.subr.mxu0 0.0
    %866 = vmatpush1.msra.mxu0 0.0
    %867 = vmatprep.subr.mxu0 0.0
    %868 = vmatpush1.msra.mxu0 0.0
    %869 = vmatprep.subr.mxu0 0.0
    %870 = vmatpush1.msra.mxu0 0.0
    %871 = vmatprep.subr.mxu0 0.0
    %872 = vmatpush1.msra.mxu0 0.0
    %873 = vmatprep.mubr.f32.mxu0 0.0
    %874 = vmatmul.mubr.f32.gmra.mrb[0].mxu0 %v807
    %v875 = vpop.f32.mrb[0].mxu0
    %v876 = vadd.f32 0.0, %v875
    %v877 = vpop.f32.mrb[0].mxu0
    %878 = vdwg.mxu0
    %v880 = vrot.slane %v876, 6
    %v882 = vadd.f32 %v697, %v880
    %v883 = vxor.u32 %v882, 2147483648
    %v884 = vmul.f32 %v883, 1.442695
    %v885 = vpow.pop %v884
    %v886 = vadd.f32 %v885, 1.0
    %v887 = vrcp.pop %v886
    %v888 = vmul.f32 1.0, %v887
    %v889 = vtanh.pop %v882
    %v891 = vrot.slane %v797, 6
    %v893 = vmul.f32 %v888, %v891
    %895 = vrot.lane.b32.xlu0 %v889, 96
    %v896 = vpop.permute.xlu0 %895
    %v898 = vmul.f32 %v888, %v896
    %900 = vrot.lane.b32.xlu0 %v898, 16
    %v901 = vpop.permute.xlu0 %900
    %v903 = vadd.f32 %v893, %v901
    %v904 = vtanh.pop %v903
    %906 = vrot.lane.b32.xlu0 %v904, 32
    %v907 = vpop.permute.xlu0 %906
    %v909 = vmul.f32 %v888, %v907
    %v911 = vrot.slane %v909, 2
    %912 = vrot.lane.b32.xlu0 %v911, 80
    %v913 = vpop.permute.xlu0 %912
    %v914 = vsel %vm705, %v913, 0
    %916 = vmatprep.subr.mxu0 0.0
    %917 = vmatpush1.msra.mxu0 %v703
    %918 = vmatprep.subr.mxu0 0.0
    %919 = vmatpush1.msra.mxu0 %v704
    %920 = vmatprep.subr.mxu0 0.0
    %921 = vmatpush1.msra.mxu0 0.0
    %922 = vmatprep.subr.mxu0 0.0
    %923 = vmatpush1.msra.mxu0 0.0
    %924 = vmatprep.subr.mxu0 0.0
    %925 = vmatpush1.msra.mxu0 0.0
    %926 = vmatprep.subr.mxu0 0.0
    %927 = vmatpush1.msra.mxu0 0.0
    %928 = vmatprep.subr.mxu0 0.0
    %929 = vmatpush1.msra.mxu0 0.0
    %930 = vmatprep.subr.mxu0 0.0
    %931 = vmatpush1.msra.mxu0 0.0
    %932 = vmatprep.subr.mxu0 0.0
    %933 = vmatpush1.msra.mxu0 0.0
    %934 = vmatprep.subr.mxu0 0.0
    %935 = vmatpush1.msra.mxu0 0.0
    %936 = vmatprep.subr.mxu0 0.0
    %937 = vmatpush1.msra.mxu0 0.0
    %938 = vmatprep.subr.mxu0 0.0
    %939 = vmatpush1.msra.mxu0 0.0
    %940 = vmatprep.subr.mxu0 0.0
    %941 = vmatpush1.msra.mxu0 0.0
    %942 = vmatprep.subr.mxu0 0.0
    %943 = vmatpush1.msra.mxu0 0.0
    %944 = vmatprep.subr.mxu0 0.0
    %945 = vmatpush1.msra.mxu0 0.0
    %946 = vmatprep.subr.mxu0 0.0
    %947 = vmatpush1.msra.mxu0 0.0
    %948 = vmatprep.subr.mxu0 0.0
    %949 = vmatpush1.msra.mxu0 0.0
    %950 = vmatprep.subr.mxu0 0.0
    %951 = vmatpush1.msra.mxu0 0.0
    %952 = vmatprep.subr.mxu0 0.0
    %953 = vmatpush1.msra.mxu0 0.0
    %954 = vmatprep.subr.mxu0 0.0
    %955 = vmatpush1.msra.mxu0 0.0
    %956 = vmatprep.subr.mxu0 0.0
    %957 = vmatpush1.msra.mxu0 0.0
    %958 = vmatprep.subr.mxu0 0.0
    %959 = vmatpush1.msra.mxu0 0.0
    %960 = vmatprep.subr.mxu0 0.0
    %961 = vmatpush1.msra.mxu0 0.0
    %962 = vmatprep.subr.mxu0 0.0
    %963 = vmatpush1.msra.mxu0 0.0
    %964 = vmatprep.subr.mxu0 0.0
    %965 = vmatpush1.msra.mxu0 0.0
    %966 = vmatprep.subr.mxu0 0.0
    %967 = vmatpush1.msra.mxu0 0.0
    %968 = vmatprep.subr.mxu0 0.0
    %969 = vmatpush1.msra.mxu0 0.0
    %970 = vmatprep.subr.mxu0 0.0
    %971 = vmatpush1.msra.mxu0 0.0
    %972 = vmatprep.subr.mxu0 0.0
    %973 = vmatpush1.msra.mxu0 0.0
    %974 = vmatprep.subr.mxu0 0.0
    %975 = vmatpush1.msra.mxu0 0.0
    %976 = vmatprep.subr.mxu0 0.0
    %977 = vmatpush1.msra.mxu0 0.0
    %978 = vmatprep.subr.mxu0 0.0
    %979 = vmatpush1.msra.mxu0 0.0
    %980 = vmatprep.mubr.f32.mxu0 0.0
    %981 = vmatmul.mubr.f32.gmra.mrb[0].mxu0 %v914
    %v982 = vpop.f32.mrb[0].mxu0
    %v983 = vadd.f32 0.0, %v982
    %v984 = vpop.f32.mrb[0].mxu0
    %985 = vdwg.mxu0
    %v987 = vrot.slane %v983, 4
    %v989 = vadd.f32 %v697, %v987
    %v990 = vxor.u32 %v989, 2147483648
    %v991 = vmul.f32 %v990, 1.442695
    %v992 = vpow.pop %v991
    %v993 = vadd.f32 %v992, 1.0
    %v994 = vrcp.pop %v993
    %v995 = vmul.f32 1.0, %v994
    %v996 = vtanh.pop %v989
    %v998 = vrot.slane %v903, 6
    %v1000 = vmul.f32 %v995, %v998
    %1002 = vrot.lane.b32.xlu0 %v996, 96
    %v1003 = vpop.permute.xlu0 %1002
    %v1005 = vmul.f32 %v995, %v1003
    %1007 = vrot.lane.b32.xlu0 %v1005, 16
    %v1008 = vpop.permute.xlu0 %1007
    %v1010 = vadd.f32 %v1000, %v1008
    %v1011 = vtanh.pop %v1010
    %1013 = vrot.lane.b32.xlu0 %v1011, 32
    %v1014 = vpop.permute.xlu0 %1013
    %v1016 = vmul.f32 %v995, %v1014
    %v1018 = vrot.slane %v1016, 4
    %1019 = vrot.lane.b32.xlu0 %v1018, 80
    %v1020 = vpop.permute.xlu0 %1019
    %v1021 = vsel %vm705, %v1020, 0
    %1023 = vmatprep.subr.mxu0 0.0
    %1024 = vmatpush1.msra.mxu0 %v703
    %1025 = vmatprep.subr.mxu0 0.0
    %1026 = vmatpush1.msra.mxu0 %v704
    %1027 = vmatprep.subr.mxu0 0.0
    %1028 = vmatpush1.msra.mxu0 0.0
    %1029 = vmatprep.subr.mxu0 0.0
    %1030 = vmatpush1.msra.mxu0 0.0
    %1031 = vmatprep.subr.mxu0 0.0
    %1032 = vmatpush1.msra.mxu0 0.0
    %1033 = vmatprep.subr.mxu0 0.0
    %1034 = vmatpush1.msra.mxu0 0.0
    %1035 = vmatprep.subr.mxu0 0.0
    %1036 = vmatpush1.msra.mxu0 0.0
    %1037 = vmatprep.subr.mxu0 0.0
    %1038 = vmatpush1.msra.mxu0 0.0
    %1039 = vmatprep.subr.mxu0 0.0
    %1040 = vmatpush1.msra.mxu0 0.0
    %1041 = vmatprep.subr.mxu0 0.0
    %1042 = vmatpush1.msra.mxu0 0.0
    %1043 = vmatprep.subr.mxu0 0.0
    %1044 = vmatpush1.msra.mxu0 0.0
    %1045 = vmatprep.subr.mxu0 0.0
    %1046 = vmatpush1.msra.mxu0 0.0
    %1047 = vmatprep.subr.mxu0 0.0
    %1048 = vmatpush1.msra.mxu0 0.0
    %1049 = vmatprep.subr.mxu0 0.0
    %1050 = vmatpush1.msra.mxu0 0.0
    %1051 = vmatprep.subr.mxu0 0.0
    %1052 = vmatpush1.msra.mxu0 0.0
    %1053 = vmatprep.subr.mxu0 0.0
    %1054 = vmatpush1.msra.mxu0 0.0
    %1055 = vmatprep.subr.mxu0 0.0
    %1056 = vmatpush1.msra.mxu0 0.0
    %1057 = vmatprep.subr.mxu0 0.0
    %1058 = vmatpush1.msra.mxu0 0.0
    %1059 = vmatprep.subr.mxu0 0.0
    %1060 = vmatpush1.msra.mxu0 0.0
    %1061 = vmatprep.subr.mxu0 0.0
    %1062 = vmatpush1.msra.mxu0 0.0
    %1063 = vmatprep.subr.mxu0 0.0
    %1064 = vmatpush1.msra.mxu0 0.0
    %1065 = vmatprep.subr.mxu0 0.0
    %1066 = vmatpush1.msra.mxu0 0.0
    %1067 = vmatprep.subr.mxu0 0.0
    %1068 = vmatpush1.msra.mxu0 0.0
    %1069 = vmatprep.subr.mxu0 0.0
    %1070 = vmatpush1.msra.mxu0 0.0
    %1071 = vmatprep.subr.mxu0 0.0
    %1072 = vmatpush1.msra.mxu0 0.0
    %1073 = vmatprep.subr.mxu0 0.0
    %1074 = vmatpush1.msra.mxu0 0.0
    %1075 = vmatprep.subr.mxu0 0.0
    %1076 = vmatpush1.msra.mxu0 0.0
    %1077 = vmatprep.subr.mxu0 0.0
    %1078 = vmatpush1.msra.mxu0 0.0
    %1079 = vmatprep.subr.mxu0 0.0
    %1080 = vmatpush1.msra.mxu0 0.0
    %1081 = vmatprep.subr.mxu0 0.0
    %1082 = vmatpush1.msra.mxu0 0.0
    %1083 = vmatprep.subr.mxu0 0.0
    %1084 = vmatpush1.msra.mxu0 0.0
    %1085 = vmatprep.subr.mxu0 0.0
    %1086 = vmatpush1.msra.mxu0 0.0
    %1087 = vmatprep.mubr.f32.mxu0 0.0
    %1088 = vmatmul.mubr.f32.gmra.mrb[0].mxu0 %v1021
    %v1089 = vpop.f32.mrb[0].mxu0
    %v1090 = vadd.f32 0.0, %v1089
    %v1091 = vpop.f32.mrb[0].mxu0
    %1092 = vdwg.mxu0
    %v1094 = vrot.slane %v1090, 2
    %v1096 = vadd.f32 %v697, %v1094
    %v1097 = vxor.u32 %v1096, 2147483648
    %v1098 = vmul.f32 %v1097, 1.442695
    %v1099 = vpow.pop %v1098
    %v1100 = vadd.f32 %v1099, 1.0
    %v1101 = vrcp.pop %v1100
    %v1102 = vmul.f32 1.0, %v1101
    %v1103 = vtanh.pop %v1096
    %v1105 = vrot.slane %v1010, 6
    %v1107 = vmul.f32 %v1102, %v1105
    %1109 = vrot.lane.b32.xlu0 %v1103, 96
    %v1110 = vpop.permute.xlu0 %1109
    %v1112 = vmul.f32 %v1102, %v1110
    %1114 = vrot.lane.b32.xlu0 %v1112, 16
    %v1115 = vpop.permute.xlu0 %1114
    %v1117 = vadd.f32 %v1107, %v1115
    %v1118 = vtanh.pop %v1117
    %1120 = vrot.lane.b32.xlu0 %v1118, 32
    %v1121 = vpop.permute.xlu0 %1120
    %v1123 = vmul.f32 %v1102, %v1121
    %v1125 = vrot.slane %v1123, 6
    %1126 = vrot.lane.b32.xlu0 %v1125, 80
    %v1127 = vpop.permute.xlu0 %1126
    %v1128 = vsel %vm705, %v1127, 0
    %1130 = vmatprep.subr.mxu0 0.0
    %1131 = vmatpush1.msra.mxu0 %v703
    %1132 = vmatprep.subr.mxu0 0.0
    %1133 = vmatpush1.msra.mxu0 %v704
    %1134 = vmatprep.subr.mxu0 0.0
    %1135 = vmatpush1.msra.mxu0 0.0
    %1136 = vmatprep.subr.mxu0 0.0
    %1137 = vmatpush1.msra.mxu0 0.0
    %1138 = vmatprep.subr.mxu0 0.0
    %1139 = vmatpush1.msra.mxu0 0.0
    %1140 = vmatprep.subr.mxu0 0.0
    %1141 = vmatpush1.msra.mxu0 0.0
    %1142 = vmatprep.subr.mxu0 0.0
    %1143 = vmatpush1.msra.mxu0 0.0
    %1144 = vmatprep.subr.mxu0 0.0
    %1145 = vmatpush1.msra.mxu0 0.0
    %1146 = vmatprep.subr.mxu0 0.0
    %1147 = vmatpush1.msra.mxu0 0.0
    %1148 = vmatprep.subr.mxu0 0.0
    %1149 = vmatpush1.msra.mxu0 0.0
    %1150 = vmatprep.subr.mxu0 0.0
    %1151 = vmatpush1.msra.mxu0 0.0
    %1152 = vmatprep.subr.mxu0 0.0
    %1153 = vmatpush1.msra.mxu0 0.0
    %1154 = vmatprep.subr.mxu0 0.0
    %1155 = vmatpush1.msra.mxu0 0.0
    %1156 = vmatprep.subr.mxu0 0.0
    %1157 = vmatpush1.msra.mxu0 0.0
    %1158 = vmatprep.subr.mxu0 0.0
    %1159 = vmatpush1.msra.mxu0 0.0
    %1160 = vmatprep.subr.mxu0 0.0
    %1161 = vmatpush1.msra.mxu0 0.0
    %1162 = vmatprep.subr.mxu0 0.0
    %1163 = vmatpush1.msra.mxu0 0.0
    %1164 = vmatprep.subr.mxu0 0.0
    %1165 = vmatpush1.msra.mxu0 0.0
    %1166 = vmatprep.subr.mxu0 0.0
    %1167 = vmatpush1.msra.mxu0 0.0
    %1168 = vmatprep.subr.mxu0 0.0
    %1169 = vmatpush1.msra.mxu0 0.0
    %1170 = vmatprep.subr.mxu0 0.0
    %1171 = vmatpush1.msra.mxu0 0.0
    %1172 = vmatprep.subr.mxu0 0.0
    %1173 = vmatpush1.msra.mxu0 0.0
    %1174 = vmatprep.subr.mxu0 0.0
    %1175 = vmatpush1.msra.mxu0 0.0
    %1176 = vmatprep.subr.mxu0 0.0
    %1177 = vmatpush1.msra.mxu0 0.0
    %1178 = vmatprep.subr.mxu0 0.0
    %1179 = vmatpush1.msra.mxu0 0.0
    %1180 = vmatprep.subr.mxu0 0.0
    %1181 = vmatpush1.msra.mxu0 0.0
    %1182 = vmatprep.subr.mxu0 0.0
    %1183 = vmatpush1.msra.mxu0 0.0
    %1184 = vmatprep.subr.mxu0 0.0
    %1185 = vmatpush1.msra.mxu0 0.0
    %1186 = vmatprep.subr.mxu0 0.0
    %1187 = vmatpush1.msra.mxu0 0.0
    %1188 = vmatprep.subr.mxu0 0.0
    %1189 = vmatpush1.msra.mxu0 0.0
    %1190 = vmatprep.subr.mxu0 0.0
    %1191 = vmatpush1.msra.mxu0 0.0
    %1192 = vmatprep.subr.mxu0 0.0
    %1193 = vmatpush1.msra.mxu0 0.0
    %1194 = vmatprep.mubr.f32.mxu0 0.0
    %1195 = vmatmul.mubr.f32.gmra.mrb[0].mxu0 %v1128
    %v1196 = vpop.f32.mrb[0].mxu0
    %v1197 = vadd.f32 0.0, %v1196
    %v1198 = vpop.f32.mrb[0].mxu0
    %1199 = vdwg.mxu0
    %v1200 = vadd.f32 %v700, %v1197
    %v1201 = vxor.u32 %v1200, 2147483648
    %v1202 = vmul.f32 %v1201, 1.442695
    %v1203 = vpow.pop %v1202
    %v1204 = vadd.f32 %v1203, 1.0
    %v1205 = vrcp.pop %v1204
    %v1206 = vmul.f32 1.0, %v1205
    %v1207 = vtanh.pop %v1200
    %v1209 = vrot.slane %v1117, 6
    %v1211 = vmul.f32 %v1206, %v1209
    %1213 = vrot.lane.b32.xlu0 %v1207, 96
    %v1214 = vpop.permute.xlu0 %1213
    %v1216 = vmul.f32 %v1206, %v1214
    %1218 = vrot.lane.b32.xlu0 %v1216, 16
    %v1219 = vpop.permute.xlu0 %1218
    %v1221 = vadd.f32 %v1211, %v1219
    %v1222 = vtanh.pop %v1221
    %1224 = vrot.lane.b32.xlu0 %v1222, 32
    %v1225 = vpop.permute.xlu0 %1224
    %v1227 = vmul.f32 %v1206, %v1225
    %1229 = vrot.lane.b32.xlu0 %v1227, 80
    %v1230 = vpop.permute.xlu0 %1229
    %v1231 = vsel %vm705, %v1230, 0
    %1233 = vmatprep.subr.mxu0 0.0
    %1234 = vmatpush1.msra.mxu0 %v703
    %1235 = vmatprep.subr.mxu0 0.0
    %1236 = vmatpush1.msra.mxu0 %v704
    %1237 = vmatprep.subr.mxu0 0.0
    %1238 = vmatpush1.msra.mxu0 0.0
    %1239 = vmatprep.subr.mxu0 0.0
    %1240 = vmatpush1.msra.mxu0 0.0
    %1241 = vmatprep.subr.mxu0 0.0
    %1242 = vmatpush1.msra.mxu0 0.0
    %1243 = vmatprep.subr.mxu0 0.0
    %1244 = vmatpush1.msra.mxu0 0.0
    %1245 = vmatprep.subr.mxu0 0.0
    %1246 = vmatpush1.msra.mxu0 0.0
    %1247 = vmatprep.subr.mxu0 0.0
    %1248 = vmatpush1.msra.mxu0 0.0
    %1249 = vmatprep.subr.mxu0 0.0
    %1250 = vmatpush1.msra.mxu0 0.0
    %1251 = vmatprep.subr.mxu0 0.0
    %1252 = vmatpush1.msra.mxu0 0.0
    %1253 = vmatprep.subr.mxu0 0.0
    %1254 = vmatpush1.msra.mxu0 0.0
    %1255 = vmatprep.subr.mxu0 0.0
    %1256 = vmatpush1.msra.mxu0 0.0
    %1257 = vmatprep.subr.mxu0 0.0
    %1258 = vmatpush1.msra.mxu0 0.0
    %1259 = vmatprep.subr.mxu0 0.0
    %1260 = vmatpush1.msra.mxu0 0.0
    %1261 = vmatprep.subr.mxu0 0.0
    %1262 = vmatpush1.msra.mxu0 0.0
    %1263 = vmatprep.subr.mxu0 0.0
    %1264 = vmatpush1.msra.mxu0 0.0
    %1265 = vmatprep.subr.mxu0 0.0
    %1266 = vmatpush1.msra.mxu0 0.0
    %1267 = vmatprep.subr.mxu0 0.0
    %1268 = vmatpush1.msra.mxu0 0.0
    %1269 = vmatprep.subr.mxu0 0.0
    %1270 = vmatpush1.msra.mxu0 0.0
    %1271 = vmatprep.subr.mxu0 0.0
    %1272 = vmatpush1.msra.mxu0 0.0
    %1273 = vmatprep.subr.mxu0 0.0
    %1274 = vmatpush1.msra.mxu0 0.0
    %1275 = vmatprep.subr.mxu0 0.0
    %1276 = vmatpush1.msra.mxu0 0.0
    %1277 = vmatprep.subr.mxu0 0.0
    %1278 = vmatpush1.msra.mxu0 0.0
    %1279 = vmatprep.subr.mxu0 0.0
    %1280 = vmatpush1.msra.mxu0 0.0
    %1281 = vmatprep.subr.mxu0 0.0
    %1282 = vmatpush1.msra.mxu0 0.0
    %1283 = vmatprep.subr.mxu0 0.0
    %1284 = vmatpush1.msra.mxu0 0.0
    %1285 = vmatprep.subr.mxu0 0.0
    %1286 = vmatpush1.msra.mxu0 0.0
    %1287 = vmatprep.subr.mxu0 0.0
    %1288 = vmatpush1.msra.mxu0 0.0
    %1289 = vmatprep.subr.mxu0 0.0
    %1290 = vmatpush1.msra.mxu0 0.0
    %1291 = vmatprep.subr.mxu0 0.0
    %1292 = vmatpush1.msra.mxu0 0.0
    %1293 = vmatprep.subr.mxu0 0.0
    %1294 = vmatpush1.msra.mxu0 0.0
    %1295 = vmatprep.subr.mxu0 0.0
    %1296 = vmatpush1.msra.mxu0 0.0
    %1297 = vmatprep.mubr.f32.mxu0 0.0
    %1298 = vmatmul.mubr.f32.gmra.mrb[0].mxu0 %v1231
    %v1299 = vpop.f32.mrb[0].mxu0
    %v1300 = vadd.f32 0.0, %v1299
    %v1301 = vpop.f32.mrb[0].mxu0
    %1302 = vdwg.mxu0
    %v1304 = vrot.slane %v1300, 6
    %v1306 = vadd.f32 %v700, %v1304
    %v1307 = vxor.u32 %v1306, 2147483648
    %v1308 = vmul.f32 %v1307, 1.442695
    %v1309 = vpow.pop %v1308
    %v1310 = vadd.f32 %v1309, 1.0
    %v1311 = vrcp.pop %v1310
    %v1312 = vmul.f32 1.0, %v1311
    %v1313 = vtanh.pop %v1306
    %v1315 = vrot.slane %v1221, 6
    %v1317 = vmul.f32 %v1312, %v1315
    %1319 = vrot.lane.b32.xlu0 %v1313, 96
    %v1320 = vpop.permute.xlu0 %1319
    %v1322 = vmul.f32 %v1312, %v1320
    %1324 = vrot.lane.b32.xlu0 %v1322, 16
    %v1325 = vpop.permute.xlu0 %1324
    %v1327 = vadd.f32 %v1317, %v1325
    %v1328 = vtanh.pop %v1327
    %1330 = vrot.lane.b32.xlu0 %v1328, 32
    %v1331 = vpop.permute.xlu0 %1330
    %v1333 = vmul.f32 %v1312, %v1331
    %v1335 = vrot.slane %v1333, 2
    %1336 = vrot.lane.b32.xlu0 %v1335, 80
    %v1337 = vpop.permute.xlu0 %1336
    %v1338 = vsel %vm705, %v1337, 0
    %1340 = vmatprep.subr.mxu0 0.0
    %1341 = vmatpush1.msra.mxu0 %v703
    %1342 = vmatprep.subr.mxu0 0.0
    %1343 = vmatpush1.msra.mxu0 %v704
    %1344 = vmatprep.subr.mxu0 0.0
    %1345 = vmatpush1.msra.mxu0 0.0
    %1346 = vmatprep.subr.mxu0 0.0
    %1347 = vmatpush1.msra.mxu0 0.0
    %1348 = vmatprep.subr.mxu0 0.0
    %1349 = vmatpush1.msra.mxu0 0.0
    %1350 = vmatprep.subr.mxu0 0.0
    %1351 = vmatpush1.msra.mxu0 0.0
    %1352 = vmatprep.subr.mxu0 0.0
    %1353 = vmatpush1.msra.mxu0 0.0
    %1354 = vmatprep.subr.mxu0 0.0
    %1355 = vmatpush1.msra.mxu0 0.0
    %1356 = vmatprep.subr.mxu0 0.0
    %1357 = vmatpush1.msra.mxu0 0.0
    %1358 = vmatprep.subr.mxu0 0.0
    %1359 = vmatpush1.msra.mxu0 0.0
    %1360 = vmatprep.subr.mxu0 0.0
    %1361 = vmatpush1.msra.mxu0 0.0
    %1362 = vmatprep.subr.mxu0 0.0
    %1363 = vmatpush1.msra.mxu0 0.0
    %1364 = vmatprep.subr.mxu0 0.0
    %1365 = vmatpush1.msra.mxu0 0.0
    %1366 = vmatprep.subr.mxu0 0.0
    %1367 = vmatpush1.msra.mxu0 0.0
    %1368 = vmatprep.subr.mxu0 0.0
    %1369 = vmatpush1.msra.mxu0 0.0
    %1370 = vmatprep.subr.mxu0 0.0
    %1371 = vmatpush1.msra.mxu0 0.0
    %1372 = vmatprep.subr.mxu0 0.0
    %1373 = vmatpush1.msra.mxu0 0.0
    %1374 = vmatprep.subr.mxu0 0.0
    %1375 = vmatpush1.msra.mxu0 0.0
    %1376 = vmatprep.subr.mxu0 0.0
    %1377 = vmatpush1.msra.mxu0 0.0
    %1378 = vmatprep.subr.mxu0 0.0
    %1379 = vmatpush1.msra.mxu0 0.0
    %1380 = vmatprep.subr.mxu0 0.0
    %1381 = vmatpush1.msra.mxu0 0.0
    %1382 = vmatprep.subr.mxu0 0.0
    %1383 = vmatpush1.msra.mxu0 0.0
    %1384 = vmatprep.subr.mxu0 0.0
    %1385 = vmatpush1.msra.mxu0 0.0
    %1386 = vmatprep.subr.mxu0 0.0
    %1387 = vmatpush1.msra.mxu0 0.0
    %1388 = vmatprep.subr.mxu0 0.0
    %1389 = vmatpush1.msra.mxu0 0.0
    %1390 = vmatprep.subr.mxu0 0.0
    %1391 = vmatpush1.msra.mxu0 0.0
    %1392 = vmatprep.subr.mxu0 0.0
    %1393 = vmatpush1.msra.mxu0 0.0
    %1394 = vmatprep.subr.mxu0 0.0
    %1395 = vmatpush1.msra.mxu0 0.0
    %1396 = vmatprep.subr.mxu0 0.0
    %1397 = vmatpush1.msra.mxu0 0.0
    %1398 = vmatprep.subr.mxu0 0.0
    %1399 = vmatpush1.msra.mxu0 0.0
    %1400 = vmatprep.subr.mxu0 0.0
    %1401 = vmatpush1.msra.mxu0 0.0
    %1402 = vmatprep.subr.mxu0 0.0
    %1403 = vmatpush1.msra.mxu0 0.0
    %1404 = vmatprep.mubr.f32.mxu0 0.0
    %1405 = vmatmul.mubr.f32.gmra.mrb[0].mxu0 %v1338
    %v1406 = vpop.f32.mrb[0].mxu0
    %v1407 = vadd.f32 0.0, %v1406
    %v1408 = vpop.f32.mrb[0].mxu0
    %1409 = vdwg.mxu0
    %v1411 = vrot.slane %v1407, 4
    %v1413 = vadd.f32 %v700, %v1411
    %v1414 = vxor.u32 %v1413, 2147483648
    %v1415 = vmul.f32 %v1414, 1.442695
    %v1416 = vpow.pop %v1415
    %v1417 = vadd.f32 %v1416, 1.0
    %v1418 = vrcp.pop %v1417
    %v1419 = vmul.f32 1.0, %v1418
    %v1420 = vtanh.pop %v1413
    %v1422 = vrot.slane %v1327, 6
    %v1424 = vmul.f32 %v1419, %v1422
    %1426 = vrot.lane.b32.xlu0 %v1420, 96
    %v1427 = vpop.permute.xlu0 %1426
    %v1429 = vmul.f32 %v1419, %v1427
    %1431 = vrot.lane.b32.xlu0 %v1429, 16
    %v1432 = vpop.permute.xlu0 %1431
    %v1434 = vadd.f32 %v1424, %v1432
    %v1435 = vtanh.pop %v1434
    %1437 = vrot.lane.b32.xlu0 %v1435, 32
    %v1438 = vpop.permute.xlu0 %1437
    %v1440 = vmul.f32 %v1419, %v1438
    %v1442 = vrot.slane %v1440, 4
    %1443 = vrot.lane.b32.xlu0 %v1442, 80
    %v1444 = vpop.permute.xlu0 %1443
    %v1445 = vsel %vm705, %v1444, 0
    %1447 = vmatprep.subr.mxu0 0.0
    %1448 = vmatpush1.msra.mxu0 %v703
    %1449 = vmatprep.subr.mxu0 0.0
    %1450 = vmatpush1.msra.mxu0 %v704
    %1451 = vmatprep.subr.mxu0 0.0
    %1452 = vmatpush1.msra.mxu0 0.0
    %1453 = vmatprep.subr.mxu0 0.0
    %1454 = vmatpush1.msra.mxu0 0.0
    %1455 = vmatprep.subr.mxu0 0.0
    %1456 = vmatpush1.msra.mxu0 0.0
    %1457 = vmatprep.subr.mxu0 0.0
    %1458 = vmatpush1.msra.mxu0 0.0
    %1459 = vmatprep.subr.mxu0 0.0
    %1460 = vmatpush1.msra.mxu0 0.0
    %1461 = vmatprep.subr.mxu0 0.0
    %1462 = vmatpush1.msra.mxu0 0.0
    %1463 = vmatprep.subr.mxu0 0.0
    %1464 = vmatpush1.msra.mxu0 0.0
    %1465 = vmatprep.subr.mxu0 0.0
    %1466 = vmatpush1.msra.mxu0 0.0
    %1467 = vmatprep.subr.mxu0 0.0
    %1468 = vmatpush1.msra.mxu0 0.0
    %1469 = vmatprep.subr.mxu0 0.0
    %1470 = vmatpush1.msra.mxu0 0.0
    %1471 = vmatprep.subr.mxu0 0.0
    %1472 = vmatpush1.msra.mxu0 0.0
    %1473 = vmatprep.subr.mxu0 0.0
    %1474 = vmatpush1.msra.mxu0 0.0
    %1475 = vmatprep.subr.mxu0 0.0
    %1476 = vmatpush1.msra.mxu0 0.0
    %1477 = vmatprep.subr.mxu0 0.0
    %1478 = vmatpush1.msra.mxu0 0.0
    %1479 = vmatprep.subr.mxu0 0.0
    %1480 = vmatpush1.msra.mxu0 0.0
    %1481 = vmatprep.subr.mxu0 0.0
    %1482 = vmatpush1.msra.mxu0 0.0
    %1483 = vmatprep.subr.mxu0 0.0
    %1484 = vmatpush1.msra.mxu0 0.0
    %1485 = vmatprep.subr.mxu0 0.0
    %1486 = vmatpush1.msra.mxu0 0.0
    %1487 = vmatprep.subr.mxu0 0.0
    %1488 = vmatpush1.msra.mxu0 0.0
    %1489 = vmatprep.subr.mxu0 0.0
    %1490 = vmatpush1.msra.mxu0 0.0
    %1491 = vmatprep.subr.mxu0 0.0
    %1492 = vmatpush1.msra.mxu0 0.0
    %1493 = vmatprep.subr.mxu0 0.0
    %1494 = vmatpush1.msra.mxu0 0.0
    %1495 = vmatprep.subr.mxu0 0.0
    %1496 = vmatpush1.msra.mxu0 0.0
    %1497 = vmatprep.subr.mxu0 0.0
    %1498 = vmatpush1.msra.mxu0 0.0
    %1499 = vmatprep.subr.mxu0 0.0
    %1500 = vmatpush1.msra.mxu0 0.0
    %1501 = vmatprep.subr.mxu0 0.0
    %1502 = vmatpush1.msra.mxu0 0.0
    %1503 = vmatprep.subr.mxu0 0.0
    %1504 = vmatpush1.msra.mxu0 0.0
    %1505 = vmatprep.subr.mxu0 0.0
    %1506 = vmatpush1.msra.mxu0 0.0
    %1507 = vmatprep.subr.mxu0 0.0
    %1508 = vmatpush1.msra.mxu0 0.0
    %1509 = vmatprep.subr.mxu0 0.0
    %1510 = vmatpush1.msra.mxu0 0.0
    %1511 = vmatprep.mubr.f32.mxu0 0.0
    %1512 = vmatmul.mubr.f32.gmra.mrb[0].mxu0 %v1445
    %v1513 = vpop.f32.mrb[0].mxu0
    %v1514 = vadd.f32 0.0, %v1513
    %v1515 = vpop.f32.mrb[0].mxu0
    %1516 = vdwg.mxu0
    %v1518 = vrot.slane %v1514, 2
    %v1520 = vadd.f32 %v700, %v1518
    %v1521 = vxor.u32 %v1520, 2147483648
    %v1522 = vmul.f32 %v1521, 1.442695
    %v1523 = vpow.pop %v1522
    %v1524 = vadd.f32 %v1523, 1.0
    %v1525 = vrcp.pop %v1524
    %v1526 = vmul.f32 1.0, %v1525
    %v1527 = vtanh.pop %v1520
    %v1529 = vrot.slane %v1434, 6
    %v1531 = vmul.f32 %v1526, %v1529
    %1533 = vrot.lane.b32.xlu0 %v1527, 96
    %v1534 = vpop.permute.xlu0 %1533
    %v1536 = vmul.f32 %v1526, %v1534
    %1538 = vrot.lane.b32.xlu0 %v1536, 16
    %v1539 = vpop.permute.xlu0 %1538
    %v1541 = vadd.f32 %v1531, %v1539
    %v1542 = vtanh.pop %v1541
    %1544 = vrot.lane.b32.xlu0 %v1542, 32
    %v1545 = vpop.permute.xlu0 %1544
    %v1547 = vmul.f32 %v1526, %v1545
    %v1548 = vmax.f32 %v1547, 0.0
    %v1549 = vpack.c.bf16 %v1548, %v1548
    %v1550 = vld [vmem:[%s4] sm:$0xff]
    %v1551 = vld [vmem:[%s4 + $0x8] sm:$0xff]
    %v1552 = vld [vmem:[%s4 + $0x10] sm:$0xff]
    %v1553 = vld [vmem:[%s4 + $0x18] sm:$0xff]
    %v1554 = vld [vmem:[%s4 + $0x20] sm:$0xff]
    %v1555 = vld [vmem:[%s4 + $0x28] sm:$0xff]
    %v1556 = vld [vmem:[%s4 + $0x30] sm:$0xff]
    %v1557 = vld [vmem:[%s4 + $0x38] sm:$0xff]
    %v1558 = vld [vmem:[%s5] sm:$0xff]
    %v1560 = vlaneseq
    %v1561 = vshrl.u32 %v1560, 7
    %v1562 = vsub.s32 0, %v1561
    %v1563 = vrot.slane %v1558, %v1562
    %v1564 = vlaneseq
    %v1565 = vshrl.u32 %v1564, 7
    %v1566 = vsub.s32 1, %v1565
    %v1567 = vrot.slane %v1558, %v1566
    %v1568 = vlaneseq
    %v1569 = vshrl.u32 %v1568, 7
    %v1570 = vsub.s32 2, %v1569
    %v1571 = vrot.slane %v1558, %v1570
    %v1572 = vlaneseq
    %v1573 = vshrl.u32 %v1572, 7
    %v1574 = vsub.s32 3, %v1573
    %v1575 = vrot.slane %v1558, %v1574
    %v1576 = vlaneseq
    %v1577 = vshrl.u32 %v1576, 7
    %v1578 = vsub.s32 4, %v1577
    %v1579 = vrot.slane %v1558, %v1578
    %v1580 = vlaneseq
    %v1581 = vshrl.u32 %v1580, 7
    %v1582 = vsub.s32 5, %v1581
    %v1583 = vrot.slane %v1558, %v1582
    %v1584 = vlaneseq
    %v1585 = vshrl.u32 %v1584, 7
    %v1586 = vsub.s32 6, %v1585
    %v1587 = vrot.slane %v1558, %v1586
    %v1588 = vlaneseq
    %v1589 = vshrl.u32 %v1588, 7
    %v1590 = vsub.s32 7, %v1589
    %v1591 = vrot.slane %v1558, %v1590
    %v1601 = vrot.slane %v1549, 3
    %1602 = vrot.lane.b32.xlu0 %v1601, 80
    %v1603 = vpop.permute.xlu0 %1602
    %v1612 = vunpack.c.l.b16 %v1550
    %v1613 = vunpack.c.h.b16 %v1550
    %v1614 = vunpack.c.l.b16 %v1551
    %v1615 = vunpack.c.h.b16 %v1551
    %v1616 = vunpack.c.l.b16 %v1552
    %v1617 = vunpack.c.h.b16 %v1552
    %v1618 = vunpack.c.l.b16 %v1553
    %v1619 = vunpack.c.h.b16 %v1553
    %v1620 = vunpack.c.l.b16 %v1554
    %v1621 = vunpack.c.h.b16 %v1554
    %v1622 = vunpack.c.l.b16 %v1555
    %v1623 = vunpack.c.h.b16 %v1555
    %v1624 = vunpack.c.l.b16 %v1556
    %v1625 = vunpack.c.h.b16 %v1556
    %v1626 = vunpack.c.l.b16 %v1557
    %v1627 = vunpack.c.h.b16 %v1557
    %v1628 = vpack.c.b16 %v1620, %v1612
    %v1629 = vpack.c.b16 %v1621, %v1613
    %v1630 = vpack.c.b16 %v1622, %v1614
    %v1631 = vpack.c.b16 %v1623, %v1615
    %v1632 = vpack.c.b16 %v1624, %v1616
    %v1633 = vpack.c.b16 %v1625, %v1617
    %v1634 = vpack.c.b16 %v1626, %v1618
    %v1635 = vpack.c.b16 %v1627, %v1619
    %v1645 = vsel %vm705, %v1603, 0
    %1647 = vmatprep.subr.bf16.mxu0 %v1629
    %1648 = vmatpush1.bf16.msra.mxu0 %v1628
    %1649 = vmatprep.subr.bf16.mxu0 0
    %1650 = vmatpush1.bf16.msra.mxu0 0
    %1651 = vmatprep.subr.bf16.mxu0 0
    %1652 = vmatpush1.bf16.msra.mxu0 0
    %1653 = vmatprep.subr.bf16.mxu0 0
    %1654 = vmatpush1.bf16.msra.mxu0 0
    %1655 = vmatprep.subr.bf16.mxu0 0
    %1656 = vmatpush1.bf16.msra.mxu0 0
    %1657 = vmatprep.subr.bf16.mxu0 0
    %1658 = vmatpush1.bf16.msra.mxu0 0
    %1659 = vmatprep.subr.bf16.mxu0 0
    %1660 = vmatpush1.bf16.msra.mxu0 0
    %1661 = vmatprep.subr.bf16.mxu0 0
    %1662 = vmatpush1.bf16.msra.mxu0 0
    %1663 = vmatprep.subr.bf16.mxu0 0
    %1664 = vmatpush1.bf16.msra.mxu0 0
    %1665 = vmatprep.subr.bf16.mxu0 0
    %1666 = vmatpush1.bf16.msra.mxu0 0
    %1667 = vmatprep.subr.bf16.mxu0 0
    %1668 = vmatpush1.bf16.msra.mxu0 0
    %1669 = vmatprep.subr.bf16.mxu0 0
    %1670 = vmatpush1.bf16.msra.mxu0 0
    %1671 = vmatprep.subr.bf16.mxu0 0
    %1672 = vmatpush1.bf16.msra.mxu0 0
    %1673 = vmatprep.subr.bf16.mxu0 0
    %1674 = vmatpush1.bf16.msra.mxu0 0
    %1675 = vmatprep.subr.bf16.mxu0 0
    %1676 = vmatpush1.bf16.msra.mxu0 0
    %1677 = vmatprep.subr.bf16.mxu0 0
    %1678 = vmatpush1.bf16.msra.mxu0 0
    %1679 = vmatprep.mubr.bf16.mxu0 0
    %1680 = vmatmul.mubr.bf16.gmra.mrb[0].mxu0 %v1645
    %v1681 = vpop.f32.mrb[0].mxu0
    %v1682 = vadd.f32 %v1563, %v1681
    %v1683 = vpop.f32.mrb[0].mxu0
    %v1684 = vadd.f32 %v1567, %v1683
    %v1685 = vpop.f32.mrb[0].mxu0
    %v1686 = vpop.f32.mrb[0].mxu0
    %1687 = vdwg.mxu0
    %1688 = vmatprep.subr.bf16.mxu0 %v1631
    %1689 = vmatpush1.bf16.msra.mxu0 %v1630
    %1690 = vmatprep.subr.bf16.mxu0 0
    %1691 = vmatpush1.bf16.msra.mxu0 0
    %1692 = vmatprep.subr.bf16.mxu0 0
    %1693 = vmatpush1.bf16.msra.mxu0 0
    %1694 = vmatprep.subr.bf16.mxu0 0
    %1695 = vmatpush1.bf16.msra.mxu0 0
    %1696 = vmatprep.subr.bf16.mxu0 0
    %1697 = vmatpush1.bf16.msra.mxu0 0
    %1698 = vmatprep.subr.bf16.mxu0 0
    %1699 = vmatpush1.bf16.msra.mxu0 0
    %1700 = vmatprep.subr.bf16.mxu0 0
    %1701 = vmatpush1.bf16.msra.mxu0 0
    %1702 = vmatprep.subr.bf16.mxu0 0
    %1703 = vmatpush1.bf16.msra.mxu0 0
    %1704 = vmatprep.subr.bf16.mxu0 0
    %1705 = vmatpush1.bf16.msra.mxu0 0
    %1706 = vmatprep.subr.bf16.mxu0 0
    %1707 = vmatpush1.bf16.msra.mxu0 0
    %1708 = vmatprep.subr.bf16.mxu0 0
    %1709 = vmatpush1.bf16.msra.mxu0 0
    %1710 = vmatprep.subr.bf16.mxu0 0
    %1711 = vmatpush1.bf16.msra.mxu0 0
    %1712 = vmatprep.subr.bf16.mxu0 0
    %1713 = vmatpush1.bf16.msra.mxu0 0
    %1714 = vmatprep.subr.bf16.mxu0 0
    %1715 = vmatpush1.bf16.msra.mxu0 0
    %1716 = vmatprep.subr.bf16.mxu0 0
    %1717 = vmatpush1.bf16.msra.mxu0 0
    %1718 = vmatprep.subr.bf16.mxu0 0
    %1719 = vmatpush1.bf16.msra.mxu0 0
    %1720 = vmatprep.mubr.bf16.mxu0 0
    %1721 = vmatmul.mubr.bf16.gmra.mrb[0].mxu0 %v1645
    %v1722 = vpop.f32.mrb[0].mxu0
    %v1723 = vadd.f32 %v1571, %v1722
    %v1724 = vpop.f32.mrb[0].mxu0
    %v1725 = vadd.f32 %v1575, %v1724
    %v1726 = vpop.f32.mrb[0].mxu0
    %v1727 = vpop.f32.mrb[0].mxu0
    %1728 = vdwg.mxu0
    %1729 = vmatprep.subr.bf16.mxu0 %v1633
    %1730 = vmatpush1.bf16.msra.mxu0 %v1632
    %1731 = vmatprep.subr.bf16.mxu0 0
    %1732 = vmatpush1.bf16.msra.mxu0 0
    %1733 = vmatprep.subr.bf16.mxu0 0
    %1734 = vmatpush1.bf16.msra.mxu0 0
    %1735 = vmatprep.subr.bf16.mxu0 0
    %1736 = vmatpush1.bf16.msra.mxu0 0
    %1737 = vmatprep.subr.bf16.mxu0 0
    %1738 = vmatpush1.bf16.msra.mxu0 0
    %1739 = vmatprep.subr.bf16.mxu0 0
    %1740 = vmatpush1.bf16.msra.mxu0 0
    %1741 = vmatprep.subr.bf16.mxu0 0
    %1742 = vmatpush1.bf16.msra.mxu0 0
    %1743 = vmatprep.subr.bf16.mxu0 0
    %1744 = vmatpush1.bf16.msra.mxu0 0
    %1745 = vmatprep.subr.bf16.mxu0 0
    %1746 = vmatpush1.bf16.msra.mxu0 0
    %1747 = vmatprep.subr.bf16.mxu0 0
    %1748 = vmatpush1.bf16.msra.mxu0 0
    %1749 = vmatprep.subr.bf16.mxu0 0
    %1750 = vmatpush1.bf16.msra.mxu0 0
    %1751 = vmatprep.subr.bf16.mxu0 0
    %1752 = vmatpush1.bf16.msra.mxu0 0
    %1753 = vmatprep.subr.bf16.mxu0 0
    %1754 = vmatpush1.bf16.msra.mxu0 0
    %1755 = vmatprep.subr.bf16.mxu0 0
    %1756 = vmatpush1.bf16.msra.mxu0 0
    %1757 = vmatprep.subr.bf16.mxu0 0
    %1758 = vmatpush1.bf16.msra.mxu0 0
    %1759 = vmatprep.subr.bf16.mxu0 0
    %1760 = vmatpush1.bf16.msra.mxu0 0
    %1761 = vmatprep.mubr.bf16.mxu0 0
    %1762 = vmatmul.mubr.bf16.gmra.mrb[0].mxu0 %v1645
    %v1763 = vpop.f32.mrb[0].mxu0
    %v1764 = vadd.f32 %v1579, %v1763
    %v1765 = vpop.f32.mrb[0].mxu0
    %v1766 = vadd.f32 %v1583, %v1765
    %v1767 = vpop.f32.mrb[0].mxu0
    %v1768 = vpop.f32.mrb[0].mxu0
    %1769 = vdwg.mxu0
    %1770 = vmatprep.subr.bf16.mxu0 %v1635
    %1771 = vmatpush1.bf16.msra.mxu0 %v1634
    %1772 = vmatprep.subr.bf16.mxu0 0
    %1773 = vmatpush1.bf16.msra.mxu0 0
    %1774 = vmatprep.subr.bf16.mxu0 0
    %1775 = vmatpush1.bf16.msra.mxu0 0
    %1776 = vmatprep.subr.bf16.mxu0 0
    %1777 = vmatpush1.bf16.msra.mxu0 0
    %1778 = vmatprep.subr.bf16.mxu0 0
    %1779 = vmatpush1.bf16.msra.mxu0 0
    %1780 = vmatprep.subr.bf16.mxu0 0
    %1781 = vmatpush1.bf16.msra.mxu0 0
    %1782 = vmatprep.subr.bf16.mxu0 0
    %1783 = vmatpush1.bf16.msra.mxu0 0
    %1784 = vmatprep.subr.bf16.mxu0 0
    %1785 = vmatpush1.bf16.msra.mxu0 0
    %1786 = vmatprep.subr.bf16.mxu0 0
    %1787 = vmatpush1.bf16.msra.mxu0 0
    %1788 = vmatprep.subr.bf16.mxu0 0
    %1789 = vmatpush1.bf16.msra.mxu0 0
    %1790 = vmatprep.subr.bf16.mxu0 0
    %1791 = vmatpush1.bf16.msra.mxu0 0
    %1792 = vmatprep.subr.bf16.mxu0 0
    %1793 = vmatpush1.bf16.msra.mxu0 0
    %1794 = vmatprep.subr.bf16.mxu0 0
    %1795 = vmatpush1.bf16.msra.mxu0 0
    %1796 = vmatprep.subr.bf16.mxu0 0
    %1797 = vmatpush1.bf16.msra.mxu0 0
    %1798 = vmatprep.subr.bf16.mxu0 0
    %1799 = vmatpush1.bf16.msra.mxu0 0
    %1800 = vmatprep.subr.bf16.mxu0 0
    %1801 = vmatpush1.bf16.msra.mxu0 0
    %1802 = vmatprep.mubr.bf16.mxu0 0
    %1803 = vmatmul.mubr.bf16.gmra.mrb[0].mxu0 %v1645
    %v1804 = vpop.f32.mrb[0].mxu0
    %v1805 = vadd.f32 %v1587, %v1804
    %v1806 = vpop.f32.mrb[0].mxu0
    %v1807 = vadd.f32 %v1591, %v1806
    %v1808 = vpop.f32.mrb[0].mxu0
    %v1809 = vpop.f32.mrb[0].mxu0
    %1810 = vdwg.mxu0
    %v1811 = vxor.u32 %v1682, 2147483648
    %v1812 = vxor.u32 %v1684, 2147483648
    %v1813 = vxor.u32 %v1723, 2147483648
    %v1814 = vxor.u32 %v1725, 2147483648
    %v1815 = vxor.u32 %v1764, 2147483648
    %v1816 = vxor.u32 %v1766, 2147483648
    %v1817 = vxor.u32 %v1805, 2147483648
    %v1818 = vxor.u32 %v1807, 2147483648
    %v1819 = vmul.f32 %v1811, 1.442695
    %v1820 = vpow.pop %v1819
    %v1821 = vmul.f32 %v1812, 1.442695
    %v1822 = vpow.pop %v1821
    %v1823 = vmul.f32 %v1813, 1.442695
    %v1824 = vpow.pop %v1823
    %v1825 = vmul.f32 %v1814, 1.442695
    %v1826 = vpow.pop %v1825
    %v1827 = vmul.f32 %v1815, 1.442695
    %v1828 = vpow.pop %v1827
    %v1829 = vmul.f32 %v1816, 1.442695
    %v1830 = vpow.pop %v1829
    %v1831 = vmul.f32 %v1817, 1.442695
    %v1832 = vpow.pop %v1831
    %v1833 = vmul.f32 %v1818, 1.442695
    %v1834 = vpow.pop %v1833
    %v1835 = vadd.f32 %v1820, 1.0
    %v1836 = vadd.f32 %v1822, 1.0
    %v1837 = vadd.f32 %v1824, 1.0
    %v1838 = vadd.f32 %v1826, 1.0
    %v1839 = vadd.f32 %v1828, 1.0
    %v1840 = vadd.f32 %v1830, 1.0
    %v1841 = vadd.f32 %v1832, 1.0
    %v1842 = vadd.f32 %v1834, 1.0
    %v1843 = vrcp.pop %v1835
    %v1844 = vmul.f32 1.0, %v1843
    %v1845 = vrcp.pop %v1836
    %v1846 = vmul.f32 1.0, %v1845
    %v1847 = vrcp.pop %v1837
    %v1848 = vmul.f32 1.0, %v1847
    %v1849 = vrcp.pop %v1838
    %v1850 = vmul.f32 1.0, %v1849
    %v1851 = vrcp.pop %v1839
    %v1852 = vmul.f32 1.0, %v1851
    %v1853 = vrcp.pop %v1840
    %v1854 = vmul.f32 1.0, %v1853
    %v1855 = vrcp.pop %v1841
    %v1856 = vmul.f32 1.0, %v1855
    %v1857 = vrcp.pop %v1842
    %v1858 = vmul.f32 1.0, %v1857
    %v1867 = vcombine.low %v1844, %v1846
    %v1868 = vcombine.low %v1848, %v1850
    %v1870 = vunpack.c.l.s4 1983009808
    %v1871 = vunpack.c.0.s8 %v1870
    %v1872 = vlaneseq
    %v1873 = vshrl.u32 %v1872, 7
    %v1874 = vsub.s32 %v1871, %v1873
    %v1875 = vrot.slane %v1867, %v1874
    %v1877 = vunpack.c.l.s4 1983009808
    %v1878 = vunpack.c.0.s8 %v1877
    %v1879 = vlaneseq
    %v1880 = vshrl.u32 %v1879, 7
    %v1881 = vsub.s32 %v1878, %v1880
    %v1882 = vrot.slane %v1868, %v1881
    %v1883 = vcombine.low %v1875, %v1882
    %v1884 = vcombine.low %v1852, %v1854
    %v1885 = vcombine.low %v1856, %v1858
    %v1887 = vunpack.c.l.s4 1983009808
    %v1888 = vunpack.c.0.s8 %v1887
    %v1889 = vlaneseq
    %v1890 = vshrl.u32 %v1889, 7
    %v1891 = vsub.s32 %v1888, %v1890
    %v1892 = vrot.slane %v1884, %v1891
    %v1894 = vunpack.c.l.s4 1983009808
    %v1895 = vunpack.c.0.s8 %v1894
    %v1896 = vlaneseq
    %v1897 = vshrl.u32 %v1896, 7
    %v1898 = vsub.s32 %v1895, %v1897
    %v1899 = vrot.slane %v1885, %v1898
    %v1900 = vcombine.low %v1892, %v1899
    %1903 = vst [vmem:[#allocation2] sm:$0xff] %v1883
    %1904 = vst [vmem:[#allocation2 + $0x8] sm:$0xff] %v1900
    // Predicated region
    $region26: #{lstm_net_forward.1} parent=1 // pred_check
      _
    $region27: #{lstm_net_forward.1} parent=1 // pred_check_branch
      %1906 = sbr.rel (0) target = $region29
    $region28: #{lstm_net_forward.1} parent=1 // pred_region
      %s1908 = ssub.s32 256, 256
      %1909 = vsyncadd [#allocation3], %s1908
      %s1911 = sshll.u32 [#allocation2], 4
      %s1912 = int_to_ptr.vmem [resolvable:$true] %s1911
      %1914 = dma.vmem_to_hbm [thread:$0]  %s1912, 256, %s6, [#allocation3]
    $region29: #{lstm_net_forward.1} parent=1 // pred_fallthru
      _
    // Predicated region
    $region30: #{lstm_net_forward.1} parent=1 // pred_check
      _
    $region31: #{lstm_net_forward.1} parent=1 // pred_check_branch
      %1916 = sbr.rel (0) target = $region33
    $region32: #{lstm_net_forward.1} parent=1 // pred_region
      %1917 = dma.done [#allocation3], 256
    $region33: #{lstm_net_forward.1} parent=1 // pred_fallthru
      _
    %1918 = vsyncpa [#allocation3], 1

</llo_original>
